<compile_context>
chip_gen: v7x
topology: tpu7x:2x2x1
jax: 0.10.0
libtpu: 0.0.40
codegen_flags: <defaults>
</compile_context>

<pallas_src>
import jax
import jax.numpy as jnp
import numpy as np
from jax.experimental import pallas as pl
from jax.experimental.pallas import tpu as pltpu

# ---------------- problem sizes (small, consistent with the module) ----------
NUM_METAPATHS = 2     # num_metapaths
N_NODES       = 16    # N
D_IN          = 8     # in_size
D_OUT         = 8     # out_size (per head)
NUM_HEADS     = 4     # layer_num_heads
NEG_SLOPE     = 0.2   # DGL GATConv default leaky_relu slope
HD            = NUM_HEADS * D_OUT


# ---------------------------- Pallas kernel ----------------------------------
def _han_gat_kernel(h_ref, adj_ref, w_ref, attn_ref, b_ref, out_ref):
    """Single gridless invocation: all metapaths (GATConvs) in one kernel body.

    h_ref    : (M, N, D_IN)        node features per metapath
    adj_ref  : (M, N, N)           dense adjacency, adj[m, dst, src]
    w_ref    : (M, D_IN, H*D_OUT)  flat projection weights (head-minor lanes)
    attn_ref : (M, 2H, D_IN)       rows [0:H) = folded attn_l, [H:2H) = folded attn_r
    b_ref    : (M, 1, H*D_OUT)     flat bias
    out_ref  : (M, N, H*D_OUT)     head-major flattened output
    """
    num_mp    = h_ref.shape[0]
    two_h     = attn_ref.shape[1]
    num_heads = two_h // 2
    hd        = w_ref.shape[2]
    d_out     = hd // num_heads

    hm   = h_ref[...].astype(jnp.float32)               # (M, N, Din)
    mask = (adj_ref[...] > 0.0)[:, None, :, :]          # (M, 1, Nd, Ns)

    # ---- attention logits: ONE fused batched matmul for el and er ----------
    # eler[m, k, n] = sum_d attn[m, k, d] * h[m, n, d]
    eler = jnp.einsum('mkd,mnd->mkn',
                      attn_ref[...].astype(jnp.float32), hm,
                      preferred_element_type=jnp.float32)      # (M, 2H, N)
    elT = eler[:, :num_heads, :]                               # (M, H, Ns) source term
    erT = eler[:, num_heads:, :]                               # (M, H, Nd) dest   term

    # ---- masked softmax over source nodes, batched over (M, H) -------------
    e = erT[:, :, :, None] + elT[:, :, None, :]                # (M, H, Nd, Ns)
    e = jnp.maximum(e, NEG_SLOPE * e)                          # leaky_relu
    e = jnp.where(mask, e, -1e30)                              # mask non-edges
    e = e - jnp.max(e, axis=-1, keepdims=True)
    p = jnp.where(mask, jnp.exp(e), 0.0)                       # unnormalized attn
    denom = jnp.sum(p, axis=-1, keepdims=True)                 # (M, H, Nd, 1)
    # Exact normalization; zero in-degree rows keep alpha == 0 (denom == 0).
    p = p * pl.reciprocal(jnp.maximum(denom, 1e-20), approx=False)

    # ---- feature projection: ONE lane-dense matmul per metapath ------------
    feat = jnp.einsum('mnd,mdf->mnf',
                      hm, w_ref[...].astype(jnp.float32),
                      preferred_element_type=jnp.float32)      # (M, N, H*D_OUT)

    # ---- aggregation + bias + ELU; one lane-dense store per metapath -------
    for m in range(num_mp):                                    # static unroll (tiny M)
        parts = [
            jnp.dot(p[m, h], feat[m, :, h * d_out:(h + 1) * d_out],
                    preferred_element_type=jnp.float32)        # (Nd, D_OUT)
            for h in range(num_heads)
        ]
        rst = jnp.concatenate(parts, axis=-1)                  # (N, H*D_OUT) in regs
        rst = rst + b_ref[m].astype(jnp.float32)
        # ELU without inf on the not-taken branch.
        rst = jnp.where(rst > 0, rst, jnp.exp(jnp.minimum(rst, 0.0)) - 1.0)
        out_ref[m] = rst.astype(out_ref.dtype)                 # single (N, HD) store


def _fold_params(W, attn_l, attn_r):
    """Wrapper-side parameter folding (plain XLA, tiny one-time cost).

    W:(M,D_IN,HD)  attn_l/r:(M,H,D_OUT)
    Returns a single (M, 2H, D_IN) matrix such that
      (AL|AR) @ h^T gives el^T (rows 0..H-1) and er^T (rows H..2H-1).
    """
    M = W.shape[0]
    W_hm = W.reshape(M, D_IN, NUM_HEADS, D_OUT).transpose(0, 2, 1, 3)  # (M,H,Din,Dout)
    ALt = jnp.einsum('mhde,mhe->mhd', W_hm, attn_l)                    # (M,H,Din)
    ARt = jnp.einsum('mhde,mhe->mhd', W_hm, attn_r)                    # (M,H,Din)
    return jnp.concatenate([ALt, ARt], axis=1)                         # (M,2H,Din)


def han_layer_pallas(h, adj, W, attn_l, attn_r, bias):
    """h:(M,N,Din) adj:(M,N,N) W:(M,Din,HD) attn_l/r:(M,H,Dout) bias:(M,1,HD)
    Returns list of length M with (N, HD) arrays (one per metapath)."""
    M = h.shape[0]
    attn_cat = _fold_params(W, attn_l, attn_r)
    # Gridless single invocation; whole problem (<10 KB) lives in VMEM at once.
    vmem = pltpu.MemorySpace.VMEM
    out = pl.pallas_call(
        _han_gat_kernel,
        out_shape=jax.ShapeDtypeStruct((M, N_NODES, HD), jnp.float32),
        in_specs=[pl.BlockSpec(memory_space=vmem) for _ in range(5)],
        out_specs=pl.BlockSpec(memory_space=vmem),
    )(h, adj, W, attn_cat, bias)
    # HANLayer.forward returns a list of per-metapath embeddings.
    return [out[i] for i in range(M)]


# ------------------------- pure-JAX reference --------------------------------
def han_layer_reference(h, adj, W, attn_l, attn_r, bias):
    outs = []
    for i in range(h.shape[0]):
        feat = h[i] @ W[i]                                   # (N, HD)
        fh = feat.reshape(N_NODES, NUM_HEADS, D_OUT)
        el = (fh * attn_l[i][None]).sum(-1)                  # (N, H)
        er = (fh * attn_r[i][None]).sum(-1)                  # (N, H)
        e = er[:, None, :] + el[None, :, :]                  # (Nd, Ns, H)
        e = jnp.where(e > 0, e, NEG_SLOPE * e)
        m = adj[i][:, :, None] > 0
        e = jnp.where(m, e, -jnp.inf)
        p = jax.nn.softmax(e, axis=1)
        p = jnp.where(m, p, 0.0)
        p = jnp.nan_to_num(p)                                # zero in-degree rows
        rst = jnp.einsum('vuh,uhd->vhd', p, fh).reshape(N_NODES, HD)
        rst = jax.nn.elu(rst + bias[i])
        outs.append(rst)
    return outs


# ------------------------------ main ------------------------------------------
if __name__ == "__main__":
    key = jax.random.PRNGKey(0)
    k_h, k_adj, k_w, k_al, k_ar, k_b = jax.random.split(key, 6)

    # node features per metapath
    h = jax.random.normal(k_h, (NUM_METAPATHS, N_NODES, D_IN), dtype=jnp.float32)

    # dense adjacency per metapath graph (adj[dst, src]); some zero in-degree rows
    adj = (jax.random.uniform(k_adj, (NUM_METAPATHS, N_NODES, N_NODES)) < 0.3)
    adj = adj.at[:, 0, :].set(False)        # node 0 has zero in-degree in all graphs
    adj = adj.astype(jnp.float32)

    # deterministic "xavier-ish" GATConv parameters per metapath
    W      = 0.1 * jax.random.normal(k_w,  (NUM_METAPATHS, D_IN, HD), dtype=jnp.float32)
    attn_l = 0.1 * jax.random.normal(k_al, (NUM_METAPATHS, NUM_HEADS, D_OUT), dtype=jnp.float32)
    attn_r = 0.1 * jax.random.normal(k_ar, (NUM_METAPATHS, NUM_HEADS, D_OUT), dtype=jnp.float32)
    bias   = 0.1 * jax.random.normal(k_b,  (NUM_METAPATHS, 1, HD), dtype=jnp.float32)

    # TODO(synk): dropout (feat_drop / attn_drop) is 0.0 in this config and is omitted.

    outs = han_layer_pallas(h, adj, W, attn_l, attn_r, bias)
    outs = [jax.block_until_ready(o) for o in outs]

    refs = han_layer_reference(h, adj, W, attn_l, attn_r, bias)
    for o, r in zip(outs, refs):
        np.testing.assert_allclose(np.asarray(o), np.asarray(r), rtol=1e-3, atol=1e-3)

    print("KERNEL_OK")
</pallas_src>

<mosaic_0001>
module attributes {stable_mosaic.version = 11 : i64} {
  func.func @_han_gat_kernel(%arg0: memref<2x16x8xf32, #tpu.memory_space<vmem>>, %arg1: memref<2x16x16xf32, #tpu.memory_space<vmem>>, %arg2: memref<2x8x32xf32, #tpu.memory_space<vmem>>, %arg3: memref<2x8x8xf32, #tpu.memory_space<vmem>>, %arg4: memref<2x1x32xf32, #tpu.memory_space<vmem>>, %arg5: memref<2x16x32xf32, #tpu.memory_space<vmem>>) attributes {dimension_semantics = [], scalar_prefetch = 0 : i64, scratch_operands = 0 : i64, tpu.core_type = #tpu.core_type<tc>} {
    %c0 = arith.constant 0 : index
    %c0_0 = arith.constant 0 : index
    %c0_1 = arith.constant 0 : index
    %0 = vector.load %arg0[%c0, %c0_0, %c0_1] : memref<2x16x8xf32, #tpu.memory_space<vmem>>, vector<2x16x8xf32>
    %c0_2 = arith.constant 0 : index
    %c0_3 = arith.constant 0 : index
    %c0_4 = arith.constant 0 : index
    %1 = vector.load %arg1[%c0_2, %c0_3, %c0_4] : memref<2x16x16xf32, #tpu.memory_space<vmem>>, vector<2x16x16xf32>
    %cst = arith.constant 0.000000e+00 : f32
    %2 = vector.broadcast %cst : f32 to vector<2x16x16xf32>
    %3 = arith.cmpf ogt, %1, %2 : vector<2x16x16xf32>
    %4 = vector.shape_cast %3 : vector<2x16x16xi1> to vector<2x1x16x16xi1>
    %c0_5 = arith.constant 0 : index
    %c0_6 = arith.constant 0 : index
    %c0_7 = arith.constant 0 : index
    %5 = vector.load %arg3[%c0_5, %c0_6, %c0_7] : memref<2x8x8xf32, #tpu.memory_space<vmem>>, vector<2x8x8xf32>
    "tpu.trace_start"() <{level = 10 : i32, message = "mkd,mnd->mkn"}> : () -> ()
    %cst_8 = arith.constant dense<0.000000e+00> : vector<2x8x16xf32>
    %6 = tpu.matmul %5, %0, %cst_8 {dimension_numbers = #tpu.dot_dimension_numbers<[2], [2], [1], [1], [0, 0, 0, 1, 1, 1], [0], [0]>} : vector<2x8x8xf32>, vector<2x16x8xf32>, vector<2x8x16xf32> -> vector<2x8x16xf32>
    "tpu.trace_stop"() : () -> ()
    %7 = vector.extract_strided_slice %6 {offsets = [0, 0, 0], sizes = [2, 4, 16], strides = [1, 1, 1]} : vector<2x8x16xf32> to vector<2x4x16xf32>
    %8 = vector.extract_strided_slice %6 {offsets = [0, 4, 0], sizes = [2, 4, 16], strides = [1, 1, 1]} : vector<2x8x16xf32> to vector<2x4x16xf32>
    %9 = vector.shape_cast %8 : vector<2x4x16xf32> to vector<2x4x16x1xf32>
    %10 = vector.shape_cast %7 : vector<2x4x16xf32> to vector<2x4x1x16xf32>
    %11 = vector.broadcast %9 : vector<2x4x16x1xf32> to vector<2x4x16x16xf32>
    %12 = vector.broadcast %10 : vector<2x4x1x16xf32> to vector<2x4x16x16xf32>
    %13 = arith.addf %11, %12 : vector<2x4x16x16xf32>
    %cst_9 = arith.constant 2.000000e-01 : f32
    %14 = vector.broadcast %cst_9 : f32 to vector<2x4x16x16xf32>
    %15 = arith.mulf %14, %13 : vector<2x4x16x16xf32>
    %16 = arith.maximumf %13, %15 : vector<2x4x16x16xf32>
    %cst_10 = arith.constant -1.000000e+30 : f32
    %17 = vector.shape_cast %4 : vector<2x1x16x16xi1> to vector<2x1x16x16xi1>
    %18 = vector.broadcast %17 : vector<2x1x16x16xi1> to vector<2x4x16x16xi1>
    %19 = vector.broadcast %cst_10 : f32 to vector<2x4x16x16xf32>
    %20 = arith.select %18, %16, %19 : vector<2x4x16x16xi1>, vector<2x4x16x16xf32>
    %cst_11 = arith.constant dense<0xFF800000> : vector<2x4x16xf32>
    %21 = vector.multi_reduction <maximumf>, %20, %cst_11 [3] : vector<2x4x16x16xf32> to vector<2x4x16xf32>
    %22 = vector.shape_cast %21 : vector<2x4x16xf32> to vector<2x4x16x1xf32>
    %23 = vector.broadcast %22 : vector<2x4x16x1xf32> to vector<2x4x16x16xf32>
    %24 = arith.subf %20, %23 : vector<2x4x16x16xf32>
    %25 = math.exp %24 : vector<2x4x16x16xf32>
    %cst_12 = arith.constant 0.000000e+00 : f32
    %26 = vector.shape_cast %4 : vector<2x1x16x16xi1> to vector<2x1x16x16xi1>
    %27 = vector.broadcast %26 : vector<2x1x16x16xi1> to vector<2x4x16x16xi1>
    %28 = vector.broadcast %cst_12 : f32 to vector<2x4x16x16xf32>
    %29 = arith.select %27, %25, %28 : vector<2x4x16x16xi1>, vector<2x4x16x16xf32>
    %cst_13 = arith.constant dense<0.000000e+00> : vector<2x4x16xf32>
    %30 = vector.multi_reduction <add>, %29, %cst_13 [3] : vector<2x4x16x16xf32> to vector<2x4x16xf32>
    %31 = vector.shape_cast %30 : vector<2x4x16xf32> to vector<2x4x16x1xf32>
    %cst_14 = arith.constant 9.99999968E-21 : f32
    %32 = vector.broadcast %cst_14 : f32 to vector<2x4x16x1xf32>
    %33 = arith.maximumf %31, %32 : vector<2x4x16x1xf32>
    %34 = tpu.reciprocal %33 : vector<2x4x16x1xf32> -> vector<2x4x16x1xf32>
    %35 = vector.broadcast %34 : vector<2x4x16x1xf32> to vector<2x4x16x16xf32>
    %36 = arith.mulf %29, %35 : vector<2x4x16x16xf32>
    %c0_15 = arith.constant 0 : index
    %c0_16 = arith.constant 0 : index
    %c0_17 = arith.constant 0 : index
    %37 = vector.load %arg2[%c0_15, %c0_16, %c0_17] : memref<2x8x32xf32, #tpu.memory_space<vmem>>, vector<2x8x32xf32>
    "tpu.trace_start"() <{level = 10 : i32, message = "mnd,mdf->mnf"}> : () -> ()
    %cst_18 = arith.constant dense<0.000000e+00> : vector<2x16x32xf32>
    %38 = tpu.matmul %0, %37, %cst_18 {dimension_numbers = #tpu.dot_dimension_numbers<[2], [1], [1], [2], [0, 0, 0, 1, 1, 2], [0], [0]>} : vector<2x16x8xf32>, vector<2x8x32xf32>, vector<2x16x32xf32> -> vector<2x16x32xf32>
    "tpu.trace_stop"() : () -> ()
    %39 = vector.extract_strided_slice %36 {offsets = [0, 0, 0, 0], sizes = [1, 1, 16, 16], strides = [1, 1, 1, 1]} : vector<2x4x16x16xf32> to vector<1x1x16x16xf32>
    %40 = vector.shape_cast %39 : vector<1x1x16x16xf32> to vector<16x16xf32>
    %41 = vector.extract_strided_slice %38 {offsets = [0, 0, 0], sizes = [1, 16, 8], strides = [1, 1, 1]} : vector<2x16x32xf32> to vector<1x16x8xf32>
    %42 = vector.shape_cast %41 : vector<1x16x8xf32> to vector<16x8xf32>
    %cst_19 = arith.constant dense<0.000000e+00> : vector<16x8xf32>
    %43 = tpu.matmul %40, %42, %cst_19 {dimension_numbers = #tpu.dot_dimension_numbers<[1], [0], [0], [1], [0, 0, 1, 1], [], []>} : vector<16x16xf32>, vector<16x8xf32>, vector<16x8xf32> -> vector<16x8xf32>
    %44 = vector.extract_strided_slice %36 {offsets = [0, 1, 0, 0], sizes = [1, 1, 16, 16], strides = [1, 1, 1, 1]} : vector<2x4x16x16xf32> to vector<1x1x16x16xf32>
    %45 = vector.shape_cast %44 : vector<1x1x16x16xf32> to vector<16x16xf32>
    %46 = vector.extract_strided_slice %38 {offsets = [0, 0, 8], sizes = [1, 16, 8], strides = [1, 1, 1]} : vector<2x16x32xf32> to vector<1x16x8xf32>
    %47 = vector.shape_cast %46 : vector<1x16x8xf32> to vector<16x8xf32>
    %cst_20 = arith.constant dense<0.000000e+00> : vector<16x8xf32>
    %48 = tpu.matmul %45, %47, %cst_20 {dimension_numbers = #tpu.dot_dimension_numbers<[1], [0], [0], [1], [0, 0, 1, 1], [], []>} : vector<16x16xf32>, vector<16x8xf32>, vector<16x8xf32> -> vector<16x8xf32>
    %49 = vector.extract_strided_slice %36 {offsets = [0, 2, 0, 0], sizes = [1, 1, 16, 16], strides = [1, 1, 1, 1]} : vector<2x4x16x16xf32> to vector<1x1x16x16xf32>
    %50 = vector.shape_cast %49 : vector<1x1x16x16xf32> to vector<16x16xf32>
    %51 = vector.extract_strided_slice %38 {offsets = [0, 0, 16], sizes = [1, 16, 8], strides = [1, 1, 1]} : vector<2x16x32xf32> to vector<1x16x8xf32>
    %52 = vector.shape_cast %51 : vector<1x16x8xf32> to vector<16x8xf32>
    %cst_21 = arith.constant dense<0.000000e+00> : vector<16x8xf32>
    %53 = tpu.matmul %50, %52, %cst_21 {dimension_numbers = #tpu.dot_dimension_numbers<[1], [0], [0], [1], [0, 0, 1, 1], [], []>} : vector<16x16xf32>, vector<16x8xf32>, vector<16x8xf32> -> vector<16x8xf32>
    %54 = vector.extract_strided_slice %36 {offsets = [0, 3, 0, 0], sizes = [1, 1, 16, 16], strides = [1, 1, 1, 1]} : vector<2x4x16x16xf32> to vector<1x1x16x16xf32>
    %55 = vector.shape_cast %54 : vector<1x1x16x16xf32> to vector<16x16xf32>
    %56 = vector.extract_strided_slice %38 {offsets = [0, 0, 24], sizes = [1, 16, 8], strides = [1, 1, 1]} : vector<2x16x32xf32> to vector<1x16x8xf32>
    %57 = vector.shape_cast %56 : vector<1x16x8xf32> to vector<16x8xf32>
    %cst_22 = arith.constant dense<0.000000e+00> : vector<16x8xf32>
    %58 = tpu.matmul %55, %57, %cst_22 {dimension_numbers = #tpu.dot_dimension_numbers<[1], [0], [0], [1], [0, 0, 1, 1], [], []>} : vector<16x16xf32>, vector<16x8xf32>, vector<16x8xf32> -> vector<16x8xf32>
    %59 = tpu.concatenate %43, %48, %53, %58 in 1 : vector<16x8xf32>, vector<16x8xf32>, vector<16x8xf32>, vector<16x8xf32> -> vector<16x32xf32>
    %c0_23 = arith.constant 0 : index
    %c0_24 = arith.constant 0 : index
    %c0_25 = arith.constant 0 : index
    %60 = vector.load %arg4[%c0_23, %c0_24, %c0_25] : memref<2x1x32xf32, #tpu.memory_space<vmem>>, vector<1x1x32xf32>
    %61 = vector.shape_cast %60 : vector<1x1x32xf32> to vector<1x32xf32>
    %62 = vector.broadcast %61 : vector<1x32xf32> to vector<16x32xf32>
    %63 = arith.addf %59, %62 : vector<16x32xf32>
    %cst_26 = arith.constant 0.000000e+00 : f32
    %64 = vector.broadcast %cst_26 : f32 to vector<16x32xf32>
    %65 = arith.cmpf ogt, %63, %64 : vector<16x32xf32>
    %cst_27 = arith.constant 0.000000e+00 : f32
    %66 = vector.broadcast %cst_27 : f32 to vector<16x32xf32>
    %67 = arith.minimumf %63, %66 : vector<16x32xf32>
    %68 = math.exp %67 : vector<16x32xf32>
    %cst_28 = arith.constant 1.000000e+00 : f32
    %69 = vector.broadcast %cst_28 : f32 to vector<16x32xf32>
    %70 = arith.subf %68, %69 : vector<16x32xf32>
    %71 = arith.select %65, %63, %70 : vector<16x32xi1>, vector<16x32xf32>
    %c0_29 = arith.constant 0 : index
    %c0_30 = arith.constant 0 : index
    %c0_31 = arith.constant 0 : index
    %72 = vector.load %arg5[%c0_29, %c0_30, %c0_31] : memref<2x16x32xf32, #tpu.memory_space<vmem>>, vector<1x16x32xf32>
    %73 = vector.shape_cast %72 : vector<1x16x32xf32> to vector<16x32xf32>
    %74 = vector.shape_cast %71 : vector<16x32xf32> to vector<1x16x32xf32>
    tpu.vector_store %arg5[%c0_29, %c0_30, %c0_31], %74 {strides = array<i32>} : memref<2x16x32xf32, #tpu.memory_space<vmem>>, vector<1x16x32xf32>,
    %75 = vector.extract_strided_slice %36 {offsets = [1, 0, 0, 0], sizes = [1, 1, 16, 16], strides = [1, 1, 1, 1]} : vector<2x4x16x16xf32> to vector<1x1x16x16xf32>
    %76 = vector.shape_cast %75 : vector<1x1x16x16xf32> to vector<16x16xf32>
    %77 = vector.extract_strided_slice %38 {offsets = [1, 0, 0], sizes = [1, 16, 8], strides = [1, 1, 1]} : vector<2x16x32xf32> to vector<1x16x8xf32>
    %78 = vector.shape_cast %77 : vector<1x16x8xf32> to vector<16x8xf32>
    %cst_32 = arith.constant dense<0.000000e+00> : vector<16x8xf32>
    %79 = tpu.matmul %76, %78, %cst_32 {dimension_numbers = #tpu.dot_dimension_numbers<[1], [0], [0], [1], [0, 0, 1, 1], [], []>} : vector<16x16xf32>, vector<16x8xf32>, vector<16x8xf32> -> vector<16x8xf32>
    %80 = vector.extract_strided_slice %36 {offsets = [1, 1, 0, 0], sizes = [1, 1, 16, 16], strides = [1, 1, 1, 1]} : vector<2x4x16x16xf32> to vector<1x1x16x16xf32>
    %81 = vector.shape_cast %80 : vector<1x1x16x16xf32> to vector<16x16xf32>
    %82 = vector.extract_strided_slice %38 {offsets = [1, 0, 8], sizes = [1, 16, 8], strides = [1, 1, 1]} : vector<2x16x32xf32> to vector<1x16x8xf32>
    %83 = vector.shape_cast %82 : vector<1x16x8xf32> to vector<16x8xf32>
    %cst_33 = arith.constant dense<0.000000e+00> : vector<16x8xf32>
    %84 = tpu.matmul %81, %83, %cst_33 {dimension_numbers = #tpu.dot_dimension_numbers<[1], [0], [0], [1], [0, 0, 1, 1], [], []>} : vector<16x16xf32>, vector<16x8xf32>, vector<16x8xf32> -> vector<16x8xf32>
    %85 = vector.extract_strided_slice %36 {offsets = [1, 2, 0, 0], sizes = [1, 1, 16, 16], strides = [1, 1, 1, 1]} : vector<2x4x16x16xf32> to vector<1x1x16x16xf32>
    %86 = vector.shape_cast %85 : vector<1x1x16x16xf32> to vector<16x16xf32>
    %87 = vector.extract_strided_slice %38 {offsets = [1, 0, 16], sizes = [1, 16, 8], strides = [1, 1, 1]} : vector<2x16x32xf32> to vector<1x16x8xf32>
    %88 = vector.shape_cast %87 : vector<1x16x8xf32> to vector<16x8xf32>
    %cst_34 = arith.constant dense<0.000000e+00> : vector<16x8xf32>
    %89 = tpu.matmul %86, %88, %cst_34 {dimension_numbers = #tpu.dot_dimension_numbers<[1], [0], [0], [1], [0, 0, 1, 1], [], []>} : vector<16x16xf32>, vector<16x8xf32>, vector<16x8xf32> -> vector<16x8xf32>
    %90 = vector.extract_strided_slice %36 {offsets = [1, 3, 0, 0], sizes = [1, 1, 16, 16], strides = [1, 1, 1, 1]} : vector<2x4x16x16xf32> to vector<1x1x16x16xf32>
    %91 = vector.shape_cast %90 : vector<1x1x16x16xf32> to vector<16x16xf32>
    %92 = vector.extract_strided_slice %38 {offsets = [1, 0, 24], sizes = [1, 16, 8], strides = [1, 1, 1]} : vector<2x16x32xf32> to vector<1x16x8xf32>
    %93 = vector.shape_cast %92 : vector<1x16x8xf32> to vector<16x8xf32>
    %cst_35 = arith.constant dense<0.000000e+00> : vector<16x8xf32>
    %94 = tpu.matmul %91, %93, %cst_35 {dimension_numbers = #tpu.dot_dimension_numbers<[1], [0], [0], [1], [0, 0, 1, 1], [], []>} : vector<16x16xf32>, vector<16x8xf32>, vector<16x8xf32> -> vector<16x8xf32>
    %95 = tpu.concatenate %79, %84, %89, %94 in 1 : vector<16x8xf32>, vector<16x8xf32>, vector<16x8xf32>, vector<16x8xf32> -> vector<16x32xf32>
    %c1 = arith.constant 1 : index
    %c0_36 = arith.constant 0 : index
    %c0_37 = arith.constant 0 : index
    %96 = vector.load %arg4[%c1, %c0_36, %c0_37] : memref<2x1x32xf32, #tpu.memory_space<vmem>>, vector<1x1x32xf32>
    %97 = vector.shape_cast %96 : vector<1x1x32xf32> to vector<1x32xf32>
    %98 = vector.broadcast %97 : vector<1x32xf32> to vector<16x32xf32>
    %99 = arith.addf %95, %98 : vector<16x32xf32>
    %cst_38 = arith.constant 0.000000e+00 : f32
    %100 = vector.broadcast %cst_38 : f32 to vector<16x32xf32>
    %101 = arith.cmpf ogt, %99, %100 : vector<16x32xf32>
    %cst_39 = arith.constant 0.000000e+00 : f32
    %102 = vector.broadcast %cst_39 : f32 to vector<16x32xf32>
    %103 = arith.minimumf %99, %102 : vector<16x32xf32>
    %104 = math.exp %103 : vector<16x32xf32>
    %cst_40 = arith.constant 1.000000e+00 : f32
    %105 = vector.broadcast %cst_40 : f32 to vector<16x32xf32>
    %106 = arith.subf %104, %105 : vector<16x32xf32>
    %107 = arith.select %101, %99, %106 : vector<16x32xi1>, vector<16x32xf32>
    %c1_41 = arith.constant 1 : index
    %c0_42 = arith.constant 0 : index
    %c0_43 = arith.constant 0 : index
    %108 = vector.load %arg5[%c1_41, %c0_42, %c0_43] : memref<2x16x32xf32, #tpu.memory_space<vmem>>, vector<1x16x32xf32>
    %109 = vector.shape_cast %108 : vector<1x16x32xf32> to vector<16x32xf32>
    %110 = vector.shape_cast %107 : vector<16x32xf32> to vector<1x16x32xf32>
    tpu.vector_store %arg5[%c1_41, %c0_42, %c0_43], %110 {strides = array<i32>} : memref<2x16x32xf32, #tpu.memory_space<vmem>>, vector<1x16x32xf32>,
    return
  }
}

</mosaic_0001>

<llo_original>
// kernel: tpu_custom_call.1
$region0: #{tpu_custom_call.1}
  #allocation0 [shape = 'u32[]', space=smem, size = 0x4, offset = 0x4, fixed_abs, tag = 'smem constant byte address 0x4 - core index']
  #allocation1 [shape = 'u32[144,128]{1,0:T(1,128)}', space=vmem, size = 0x12000, scoped, tag = 'internal scratch']
  %s0 = inlined_call_operand.vmem [shape: f32[2,16,8], index: 0, kind: input, shape index: {}]
  %s1 = inlined_call_operand.vmem [shape: f32[2,16,16], index: 1, kind: input, shape index: {}]
  %s2 = inlined_call_operand.vmem [shape: f32[2,8,32], index: 2, kind: input, shape index: {}]
  %s3 = inlined_call_operand.hbm [shape: f32[2,8,8], index: 3, kind: input, shape index: {}]
  %s4 = inlined_call_operand.vmem [shape: f32[2,1,32], index: 4, kind: input, shape index: {}]
  %s5 = inlined_call_operand.hbm [shape: f32[2,16,32], index: 5, kind: output, shape index: {}]
  %s6 = sld [smem:[#allocation0]]
  $region34: #{tpu_custom_call.1} parent=0
    _
  %s8 = ssub.s32 1, %s6
  %s9 = scalar_select 0, %s8, %s6
  $region1: #{tpu_custom_call.1} parent=0
    #allocation2 [shape = 'u8[8192]{0}', space=vmem, size = 0x2000, scoped, tag = 'input window, operand 3, single buffered']
    #allocation3 [shape = 's32[1]{0}', space=sflag, size = 0x4, scoped, tag = 'scoped memory for tpu_custom_call.1']
    #allocation4 [shape = 's32[1]{0}', space=sflag, size = 0x4, scoped, tag = 'scoped memory for tpu_custom_call.1']
    #allocation5 [shape = 'u8[16384]{0}', space=vmem, size = 0x4000, scoped, tag = 'output window, operand 0, single buffered']
    %10 = vsyncpa [#allocation3], 0
    %11 = vsyncpa [#allocation4], 0
    // Predicated region
    $region2: #{tpu_custom_call.1} parent=1 // pred_check
      _
    $region3: #{tpu_custom_call.1} parent=1 // pred_check_branch
      %13 = sbr.rel (0) target = $region5
    $region4: #{tpu_custom_call.1} parent=1 // pred_region
      _
    $region5: #{tpu_custom_call.1} parent=1 // pred_fallthru
      _
    // Predicated region
    $region6: #{tpu_custom_call.1} parent=1 // pred_check
      _
    $region7: #{tpu_custom_call.1} parent=1 // pred_check_branch
      %15 = sbr.rel (0) target = $region9
    $region8: #{tpu_custom_call.1} parent=1 // pred_region
      _
    $region9: #{tpu_custom_call.1} parent=1 // pred_fallthru
      _
    // Predicated region
    $region10: #{tpu_custom_call.1} parent=1 // pred_check
      _
    $region11: #{tpu_custom_call.1} parent=1 // pred_check_branch
      %17 = sbr.rel (0) target = $region13
    $region12: #{tpu_custom_call.1} parent=1 // pred_region
      _
    $region13: #{tpu_custom_call.1} parent=1 // pred_fallthru
      _
    // Predicated region
    $region14: #{tpu_custom_call.1} parent=1 // pred_check
      _
    $region15: #{tpu_custom_call.1} parent=1 // pred_check_branch
      %19 = sbr.rel (0) target = $region17
    $region16: #{tpu_custom_call.1} parent=1 // pred_region
      %s21 = ssub.s32 256, 256
      %22 = vsyncadd [#allocation3], %s21
      %s23 = sshll.u32 [#allocation2], 4
      %s24 = int_to_ptr.vmem [resolvable:$true] %s23
      %29 = dma.hbm_to_vmem [thread:$0]  %s3, 256, %s24, [#allocation3], 128, 128, 8
    $region17: #{tpu_custom_call.1} parent=1 // pred_fallthru
      _
    // Predicated region
    $region18: #{tpu_custom_call.1} parent=1 // pred_check
      _
    $region19: #{tpu_custom_call.1} parent=1 // pred_check_branch
      %31 = sbr.rel (0) target = $region21
    $region20: #{tpu_custom_call.1} parent=1 // pred_region
      _
    $region21: #{tpu_custom_call.1} parent=1 // pred_fallthru
      _
    // Predicated region
    $region22: #{tpu_custom_call.1} parent=1 // pred_check
      _
    $region23: #{tpu_custom_call.1} parent=1 // pred_check_branch
      %33 = sbr.rel (0) target = $region25
    $region24: #{tpu_custom_call.1} parent=1 // pred_region
      %34 = dma.done [#allocation3], 256
    $region25: #{tpu_custom_call.1} parent=1 // pred_fallthru
      _
    %v35 = vld [vmem:[%s0] sm:$0xff]
    %v36 = vld [vmem:[%s0 + $0x8] sm:$0xff]
    %v37 = vld [vmem:[%s0 + $0x10] sm:$0xff]
    %v38 = vld [vmem:[%s0 + $0x18] sm:$0xff]
    %v39 = vld [vmem:[%s1] sm:$0xff]
    %v40 = vld [vmem:[%s1 + $0x8] sm:$0xff]
    %v41 = vld [vmem:[%s1 + $0x10] sm:$0xff]
    %v42 = vld [vmem:[%s1 + $0x18] sm:$0xff]
    %vm43 = vcmp.gt.f32.partialorder %v39, 0.0
    %vm44 = vcmp.gt.f32.partialorder %v40, 0.0
    %vm45 = vcmp.gt.f32.partialorder %v41, 0.0
    %vm46 = vcmp.gt.f32.partialorder %v42, 0.0
    %v47 = vld [vmem:[#allocation2] sm:$0xff]
    %v48 = vld [vmem:[#allocation2 + $0x8] sm:$0xff]
    %vm49 = vcmask 64512
    %v51 = vsel %vm49, %v47, 0
    %v54 = vsel %vm49, %v35, 0
    %v57 = vsel %vm49, %v36, 0
    %59 = vmatprep.subr.mxu0 0.0
    %60 = vmatpush1.xpose.msra.mxu0 %v54
    %61 = vmatprep.subr.mxu0 0.0
    %62 = vmatpush1.xpose.msra.mxu0 %v57
    %63 = vmatprep.subr.mxu0 0.0
    %64 = vmatpush1.xpose.msra.mxu0 0.0
    %65 = vmatprep.subr.mxu0 0.0
    %66 = vmatpush1.xpose.msra.mxu0 0.0
    %67 = vmatprep.subr.mxu0 0.0
    %68 = vmatpush1.xpose.msra.mxu0 0.0
    %69 = vmatprep.subr.mxu0 0.0
    %70 = vmatpush1.xpose.msra.mxu0 0.0
    %71 = vmatprep.subr.mxu0 0.0
    %72 = vmatpush1.xpose.msra.mxu0 0.0
    %73 = vmatprep.subr.mxu0 0.0
    %74 = vmatpush1.xpose.msra.mxu0 0.0
    %75 = vmatprep.subr.mxu0 0.0
    %76 = vmatpush1.xpose.msra.mxu0 0.0
    %77 = vmatprep.subr.mxu0 0.0
    %78 = vmatpush1.xpose.msra.mxu0 0.0
    %79 = vmatprep.subr.mxu0 0.0
    %80 = vmatpush1.xpose.msra.mxu0 0.0
    %81 = vmatprep.subr.mxu0 0.0
    %82 = vmatpush1.xpose.msra.mxu0 0.0
    %83 = vmatprep.subr.mxu0 0.0
    %84 = vmatpush1.xpose.msra.mxu0 0.0
    %85 = vmatprep.subr.mxu0 0.0
    %86 = vmatpush1.xpose.msra.mxu0 0.0
    %87 = vmatprep.subr.mxu0 0.0
    %88 = vmatpush1.xpose.msra.mxu0 0.0
    %89 = vmatprep.subr.mxu0 0.0
    %90 = vmatpush1.xpose.msra.mxu0 0.0
    %91 = vmatprep.subr.mxu0 0.0
    %92 = vmatpush1.xpose.msra.mxu0 0.0
    %93 = vmatprep.subr.mxu0 0.0
    %94 = vmatpush1.xpose.msra.mxu0 0.0
    %95 = vmatprep.subr.mxu0 0.0
    %96 = vmatpush1.xpose.msra.mxu0 0.0
    %97 = vmatprep.subr.mxu0 0.0
    %98 = vmatpush1.xpose.msra.mxu0 0.0
    %99 = vmatprep.subr.mxu0 0.0
    %100 = vmatpush1.xpose.msra.mxu0 0.0
    %101 = vmatprep.subr.mxu0 0.0
    %102 = vmatpush1.xpose.msra.mxu0 0.0
    %103 = vmatprep.subr.mxu0 0.0
    %104 = vmatpush1.xpose.msra.mxu0 0.0
    %105 = vmatprep.subr.mxu0 0.0
    %106 = vmatpush1.xpose.msra.mxu0 0.0
    %107 = vmatprep.subr.mxu0 0.0
    %108 = vmatpush1.xpose.msra.mxu0 0.0
    %109 = vmatprep.subr.mxu0 0.0
    %110 = vmatpush1.xpose.msra.mxu0 0.0
    %111 = vmatprep.subr.mxu0 0.0
    %112 = vmatpush1.xpose.msra.mxu0 0.0
    %113 = vmatprep.subr.mxu0 0.0
    %114 = vmatpush1.xpose.msra.mxu0 0.0
    %115 = vmatprep.subr.mxu0 0.0
    %116 = vmatpush1.xpose.msra.mxu0 0.0
    %117 = vmatprep.subr.mxu0 0.0
    %118 = vmatpush1.xpose.msra.mxu0 0.0
    %119 = vmatprep.subr.mxu0 0.0
    %120 = vmatpush1.xpose.msra.mxu0 0.0
    %121 = vmatprep.subr.mxu0 0.0
    %122 = vmatpush1.xpose.msra.mxu0 0.0
    %123 = vmatprep.mubr.f32.mxu0 0.0
    %124 = vmatmul.mubr.f32.gmra.mrb[0].mxu0 %v51
    %v125 = vpop.f32.mrb[0].mxu0
    %v126 = vadd.f32 0.0, %v125
    %v127 = vpop.f32.mrb[0].mxu0
    %128 = vdwg.mxu0
    %v130 = vsel %vm49, %v48, 0
    %v133 = vsel %vm49, %v37, 0
    %v136 = vsel %vm49, %v38, 0
    %138 = vmatprep.subr.mxu0 0.0
    %139 = vmatpush1.xpose.msra.mxu0 %v133
    %140 = vmatprep.subr.mxu0 0.0
    %141 = vmatpush1.xpose.msra.mxu0 %v136
    %142 = vmatprep.subr.mxu0 0.0
    %143 = vmatpush1.xpose.msra.mxu0 0.0
    %144 = vmatprep.subr.mxu0 0.0
    %145 = vmatpush1.xpose.msra.mxu0 0.0
    %146 = vmatprep.subr.mxu0 0.0
    %147 = vmatpush1.xpose.msra.mxu0 0.0
    %148 = vmatprep.subr.mxu0 0.0
    %149 = vmatpush1.xpose.msra.mxu0 0.0
    %150 = vmatprep.subr.mxu0 0.0
    %151 = vmatpush1.xpose.msra.mxu0 0.0
    %152 = vmatprep.subr.mxu0 0.0
    %153 = vmatpush1.xpose.msra.mxu0 0.0
    %154 = vmatprep.subr.mxu0 0.0
    %155 = vmatpush1.xpose.msra.mxu0 0.0
    %156 = vmatprep.subr.mxu0 0.0
    %157 = vmatpush1.xpose.msra.mxu0 0.0
    %158 = vmatprep.subr.mxu0 0.0
    %159 = vmatpush1.xpose.msra.mxu0 0.0
    %160 = vmatprep.subr.mxu0 0.0
    %161 = vmatpush1.xpose.msra.mxu0 0.0
    %162 = vmatprep.subr.mxu0 0.0
    %163 = vmatpush1.xpose.msra.mxu0 0.0
    %164 = vmatprep.subr.mxu0 0.0
    %165 = vmatpush1.xpose.msra.mxu0 0.0
    %166 = vmatprep.subr.mxu0 0.0
    %167 = vmatpush1.xpose.msra.mxu0 0.0
    %168 = vmatprep.subr.mxu0 0.0
    %169 = vmatpush1.xpose.msra.mxu0 0.0
    %170 = vmatprep.subr.mxu0 0.0
    %171 = vmatpush1.xpose.msra.mxu0 0.0
    %172 = vmatprep.subr.mxu0 0.0
    %173 = vmatpush1.xpose.msra.mxu0 0.0
    %174 = vmatprep.subr.mxu0 0.0
    %175 = vmatpush1.xpose.msra.mxu0 0.0
    %176 = vmatprep.subr.mxu0 0.0
    %177 = vmatpush1.xpose.msra.mxu0 0.0
    %178 = vmatprep.subr.mxu0 0.0
    %179 = vmatpush1.xpose.msra.mxu0 0.0
    %180 = vmatprep.subr.mxu0 0.0
    %181 = vmatpush1.xpose.msra.mxu0 0.0
    %182 = vmatprep.subr.mxu0 0.0
    %183 = vmatpush1.xpose.msra.mxu0 0.0
    %184 = vmatprep.subr.mxu0 0.0
    %185 = vmatpush1.xpose.msra.mxu0 0.0
    %186 = vmatprep.subr.mxu0 0.0
    %187 = vmatpush1.xpose.msra.mxu0 0.0
    %188 = vmatprep.subr.mxu0 0.0
    %189 = vmatpush1.xpose.msra.mxu0 0.0
    %190 = vmatprep.subr.mxu0 0.0
    %191 = vmatpush1.xpose.msra.mxu0 0.0
    %192 = vmatprep.subr.mxu0 0.0
    %193 = vmatpush1.xpose.msra.mxu0 0.0
    %194 = vmatprep.subr.mxu0 0.0
    %195 = vmatpush1.xpose.msra.mxu0 0.0
    %196 = vmatprep.subr.mxu0 0.0
    %197 = vmatpush1.xpose.msra.mxu0 0.0
    %198 = vmatprep.subr.mxu0 0.0
    %199 = vmatpush1.xpose.msra.mxu0 0.0
    %200 = vmatprep.subr.mxu0 0.0
    %201 = vmatpush1.xpose.msra.mxu0 0.0
    %202 = vmatprep.mubr.f32.mxu0 0.0
    %203 = vmatmul.mubr.f32.gmra.mrb[0].mxu0 %v130
    %v204 = vpop.f32.mrb[0].mxu0
    %v205 = vadd.f32 0.0, %v204
    %v206 = vpop.f32.mrb[0].mxu0
    %207 = vdwg.mxu0
    %v208 = vlaneseq
    %v209 = vshrl.u32 %v208, 7
    %v210 = vsub.s32 4, %v209
    %v211 = vrot.slane %v126, %v210
    %213 = vbcast.lane.b32.xlu0 %v211, 256
    %v214 = vpop.permute.xlu0 %213
    %s216 = sor.u32 256, 8
    %217 = vbcast.lane.b32.xlu0 %v211, %s216
    %v218 = vpop.permute.xlu0 %217
    %v219 = vlaneseq
    %v220 = vshrl.u32 %v219, 7
    %v221 = vsub.s32 5, %v220
    %v222 = vrot.slane %v126, %v221
    %224 = vbcast.lane.b32.xlu0 %v222, 256
    %v225 = vpop.permute.xlu0 %224
    %s227 = sor.u32 256, 8
    %228 = vbcast.lane.b32.xlu0 %v222, %s227
    %v229 = vpop.permute.xlu0 %228
    %v230 = vlaneseq
    %v231 = vshrl.u32 %v230, 7
    %v232 = vsub.s32 6, %v231
    %v233 = vrot.slane %v126, %v232
    %235 = vbcast.lane.b32.xlu0 %v233, 256
    %v236 = vpop.permute.xlu0 %235
    %s238 = sor.u32 256, 8
    %239 = vbcast.lane.b32.xlu0 %v233, %s238
    %v240 = vpop.permute.xlu0 %239
    %v241 = vlaneseq
    %v242 = vshrl.u32 %v241, 7
    %v243 = vsub.s32 7, %v242
    %v244 = vrot.slane %v126, %v243
    %246 = vbcast.lane.b32.xlu0 %v244, 256
    %v247 = vpop.permute.xlu0 %246
    %s249 = sor.u32 256, 8
    %250 = vbcast.lane.b32.xlu0 %v244, %s249
    %v251 = vpop.permute.xlu0 %250
    %v252 = vlaneseq
    %v253 = vshrl.u32 %v252, 7
    %v254 = vsub.s32 4, %v253
    %v255 = vrot.slane %v205, %v254
    %257 = vbcast.lane.b32.xlu0 %v255, 256
    %v258 = vpop.permute.xlu0 %257
    %s260 = sor.u32 256, 8
    %261 = vbcast.lane.b32.xlu0 %v255, %s260
    %v262 = vpop.permute.xlu0 %261
    %v263 = vlaneseq
    %v264 = vshrl.u32 %v263, 7
    %v265 = vsub.s32 5, %v264
    %v266 = vrot.slane %v205, %v265
    %268 = vbcast.lane.b32.xlu0 %v266, 256
    %v269 = vpop.permute.xlu0 %268
    %s271 = sor.u32 256, 8
    %272 = vbcast.lane.b32.xlu0 %v266, %s271
    %v273 = vpop.permute.xlu0 %272
    %v274 = vlaneseq
    %v275 = vshrl.u32 %v274, 7
    %v276 = vsub.s32 6, %v275
    %v277 = vrot.slane %v205, %v276
    %279 = vbcast.lane.b32.xlu0 %v277, 256
    %v280 = vpop.permute.xlu0 %279
    %s282 = sor.u32 256, 8
    %283 = vbcast.lane.b32.xlu0 %v277, %s282
    %v284 = vpop.permute.xlu0 %283
    %v285 = vlaneseq
    %v286 = vshrl.u32 %v285, 7
    %v287 = vsub.s32 7, %v286
    %v288 = vrot.slane %v205, %v287
    %290 = vbcast.lane.b32.xlu0 %v288, 256
    %v291 = vpop.permute.xlu0 %290
    %s293 = sor.u32 256, 8
    %294 = vbcast.lane.b32.xlu0 %v288, %s293
    %v295 = vpop.permute.xlu0 %294
    %v299 = vunpack.c.l.s4 1966171168
    %v300 = vunpack.c.0.s8 %v299
    %v301 = vlaneseq
    %v302 = vshrl.u32 %v301, 7
    %v303 = vsub.s32 %v300, %v302
    %v304 = vrot.slane %v126, %v303
    %v305 = vcombine.high %v304, %v304
    %v307 = vunpack.c.l.s4 1966171168
    %v308 = vunpack.c.0.s8 %v307
    %v309 = vlaneseq
    %v310 = vshrl.u32 %v309, 7
    %v311 = vsub.s32 %v308, %v310
    %v312 = vrot.slane %v304, %v311
    %v314 = vunpack.c.l.s4 1966171168
    %v315 = vunpack.c.0.s8 %v314
    %v316 = vlaneseq
    %v317 = vshrl.u32 %v316, 7
    %v318 = vsub.s32 %v315, %v317
    %v319 = vrot.slane %v305, %v318
    %v320 = vcombine.high %v312, %v312
    %v321 = vcombine.high %v319, %v319
    %v323 = vunpack.c.l.s4 1966171168
    %v324 = vunpack.c.0.s8 %v323
    %v325 = vlaneseq
    %v326 = vshrl.u32 %v325, 7
    %v327 = vsub.s32 %v324, %v326
    %v328 = vrot.slane %v205, %v327
    %v329 = vcombine.high %v328, %v328
    %v331 = vunpack.c.l.s4 1966171168
    %v332 = vunpack.c.0.s8 %v331
    %v333 = vlaneseq
    %v334 = vshrl.u32 %v333, 7
    %v335 = vsub.s32 %v332, %v334
    %v336 = vrot.slane %v328, %v335
    %v338 = vunpack.c.l.s4 1966171168
    %v339 = vunpack.c.0.s8 %v338
    %v340 = vlaneseq
    %v341 = vshrl.u32 %v340, 7
    %v342 = vsub.s32 %v339, %v341
    %v343 = vrot.slane %v329, %v342
    %v344 = vcombine.high %v336, %v336
    %v345 = vcombine.high %v343, %v343
    %v346 = vlaneseq
    %v347 = vshrl.u32 %v346, 7
    %v348 = vsub.s32 0, %v347
    %v349 = vrot.slane %v312, %v348
    %v350 = vlaneseq
    %v351 = vshrl.u32 %v350, 7
    %v352 = vsub.s32 0, %v351
    %v353 = vrot.slane %v319, %v352
    %v354 = vlaneseq
    %v355 = vshrl.u32 %v354, 7
    %v356 = vsub.s32 0, %v355
    %v357 = vrot.slane %v320, %v356
    %v358 = vlaneseq
    %v359 = vshrl.u32 %v358, 7
    %v360 = vsub.s32 0, %v359
    %v361 = vrot.slane %v321, %v360
    %v362 = vlaneseq
    %v363 = vshrl.u32 %v362, 7
    %v364 = vsub.s32 0, %v363
    %v365 = vrot.slane %v336, %v364
    %v366 = vlaneseq
    %v367 = vshrl.u32 %v366, 7
    %v368 = vsub.s32 0, %v367
    %v369 = vrot.slane %v343, %v368
    %v370 = vlaneseq
    %v371 = vshrl.u32 %v370, 7
    %v372 = vsub.s32 0, %v371
    %v373 = vrot.slane %v344, %v372
    %v374 = vlaneseq
    %v375 = vshrl.u32 %v374, 7
    %v376 = vsub.s32 0, %v375
    %v377 = vrot.slane %v345, %v376
    %v386 = vadd.f32 %v214, %v349
    %v387 = vadd.f32 %v218, %v349
    %v388 = vadd.f32 %v225, %v353
    %v389 = vadd.f32 %v229, %v353
    %v390 = vadd.f32 %v236, %v357
    %v391 = vadd.f32 %v240, %v357
    %v392 = vadd.f32 %v247, %v361
    %v393 = vadd.f32 %v251, %v361
    %v394 = vadd.f32 %v258, %v365
    %v395 = vadd.f32 %v262, %v365
    %v396 = vadd.f32 %v269, %v369
    %v397 = vadd.f32 %v273, %v369
    %v398 = vadd.f32 %v280, %v373
    %v399 = vadd.f32 %v284, %v373
    %v400 = vadd.f32 %v291, %v377
    %v401 = vadd.f32 %v295, %v377
    %v402 = vmul.f32 %v386, 0.2
    %v403 = vmul.f32 %v387, 0.2
    %v404 = vmul.f32 %v388, 0.2
    %v405 = vmul.f32 %v389, 0.2
    %v406 = vmul.f32 %v390, 0.2
    %v407 = vmul.f32 %v391, 0.2
    %v408 = vmul.f32 %v392, 0.2
    %v409 = vmul.f32 %v393, 0.2
    %v410 = vmul.f32 %v394, 0.2
    %v411 = vmul.f32 %v395, 0.2
    %v412 = vmul.f32 %v396, 0.2
    %v413 = vmul.f32 %v397, 0.2
    %v414 = vmul.f32 %v398, 0.2
    %v415 = vmul.f32 %v399, 0.2
    %v416 = vmul.f32 %v400, 0.2
    %v417 = vmul.f32 %v401, 0.2
    %v418 = vmax.f32 %v386, %v402
    %v419 = vmax.f32 %v387, %v403
    %v420 = vmax.f32 %v388, %v404
    %v421 = vmax.f32 %v389, %v405
    %v422 = vmax.f32 %v390, %v406
    %v423 = vmax.f32 %v391, %v407
    %v424 = vmax.f32 %v392, %v408
    %v425 = vmax.f32 %v393, %v409
    %v426 = vmax.f32 %v394, %v410
    %v427 = vmax.f32 %v395, %v411
    %v428 = vmax.f32 %v396, %v412
    %v429 = vmax.f32 %v397, %v413
    %v430 = vmax.f32 %v398, %v414
    %v431 = vmax.f32 %v399, %v415
    %v432 = vmax.f32 %v400, %v416
    %v433 = vmax.f32 %v401, %v417
    %v434 = vsel %vm43, 1, 0
    %v435 = vsel %vm44, 1, 0
    %v436 = vsel %vm45, 1, 0
    %v437 = vsel %vm46, 1, 0
    %vm438 = vcmp.eq.s32.totalorder %v434, 1
    %vm439 = vcmp.eq.s32.totalorder %v435, 1
    %vm440 = vcmp.eq.s32.totalorder %v436, 1
    %vm441 = vcmp.eq.s32.totalorder %v437, 1
    %v442 = vsel %vm438, %v418, -1e+30
    %v443 = vsel %vm439, %v419, -1e+30
    %v444 = vsel %vm438, %v420, -1e+30
    %v445 = vsel %vm439, %v421, -1e+30
    %v446 = vsel %vm438, %v422, -1e+30
    %v447 = vsel %vm439, %v423, -1e+30
    %v448 = vsel %vm438, %v424, -1e+30
    %v449 = vsel %vm439, %v425, -1e+30
    %v450 = vsel %vm440, %v426, -1e+30
    %v451 = vsel %vm441, %v427, -1e+30
    %v452 = vsel %vm440, %v428, -1e+30
    %v453 = vsel %vm441, %v429, -1e+30
    %v454 = vsel %vm440, %v430, -1e+30
    %v455 = vsel %vm441, %v431, -1e+30
    %v456 = vsel %vm440, %v432, -1e+30
    %v457 = vsel %vm441, %v433, -1e+30
    %vm458 = vcmask 130048
    %v459 = vsel %vm458, %v442, -inf
    %460 = vmax.xlane.f32.xlu0 %v459
    %v461 = vpop.xlane.xlu0 %460
    %v462 = vsel %vm458, %v443, -inf
    %463 = vmax.xlane.f32.xlu0 %v462
    %v464 = vpop.xlane.xlu0 %463
    %v465 = vsel %vm458, %v444, -inf
    %466 = vmax.xlane.f32.xlu0 %v465
    %v467 = vpop.xlane.xlu0 %466
    %v468 = vsel %vm458, %v445, -inf
    %469 = vmax.xlane.f32.xlu0 %v468
    %v470 = vpop.xlane.xlu0 %469
    %v471 = vsel %vm458, %v446, -inf
    %472 = vmax.xlane.f32.xlu0 %v471
    %v473 = vpop.xlane.xlu0 %472
    %v474 = vsel %vm458, %v447, -inf
    %475 = vmax.xlane.f32.xlu0 %v474
    %v476 = vpop.xlane.xlu0 %475
    %v477 = vsel %vm458, %v448, -inf
    %478 = vmax.xlane.f32.xlu0 %v477
    %v479 = vpop.xlane.xlu0 %478
    %v480 = vsel %vm458, %v449, -inf
    %481 = vmax.xlane.f32.xlu0 %v480
    %v482 = vpop.xlane.xlu0 %481
    %v483 = vsel %vm458, %v450, -inf
    %484 = vmax.xlane.f32.xlu0 %v483
    %v485 = vpop.xlane.xlu0 %484
    %v486 = vsel %vm458, %v451, -inf
    %487 = vmax.xlane.f32.xlu0 %v486
    %v488 = vpop.xlane.xlu0 %487
    %v489 = vsel %vm458, %v452, -inf
    %490 = vmax.xlane.f32.xlu0 %v489
    %v491 = vpop.xlane.xlu0 %490
    %v492 = vsel %vm458, %v453, -inf
    %493 = vmax.xlane.f32.xlu0 %v492
    %v494 = vpop.xlane.xlu0 %493
    %v495 = vsel %vm458, %v454, -inf
    %496 = vmax.xlane.f32.xlu0 %v495
    %v497 = vpop.xlane.xlu0 %496
    %v498 = vsel %vm458, %v455, -inf
    %499 = vmax.xlane.f32.xlu0 %v498
    %v500 = vpop.xlane.xlu0 %499
    %v501 = vsel %vm458, %v456, -inf
    %502 = vmax.xlane.f32.xlu0 %v501
    %v503 = vpop.xlane.xlu0 %502
    %v504 = vsel %vm458, %v457, -inf
    %505 = vmax.xlane.f32.xlu0 %v504
    %v506 = vpop.xlane.xlu0 %505
    %v507 = vsub.f32 %v442, %v461
    %v508 = vsub.f32 %v443, %v464
    %v509 = vsub.f32 %v444, %v467
    %v510 = vsub.f32 %v445, %v470
    %v511 = vsub.f32 %v446, %v473
    %v512 = vsub.f32 %v447, %v476
    %v513 = vsub.f32 %v448, %v479
    %v514 = vsub.f32 %v449, %v482
    %v515 = vsub.f32 %v450, %v485
    %v516 = vsub.f32 %v451, %v488
    %v517 = vsub.f32 %v452, %v491
    %v518 = vsub.f32 %v453, %v494
    %v519 = vsub.f32 %v454, %v497
    %v520 = vsub.f32 %v455, %v500
    %v521 = vsub.f32 %v456, %v503
    %v522 = vsub.f32 %v457, %v506
    %v523 = vmul.f32 %v507, 1.442695
    %v524 = vpow.pop %v523
    %v525 = vmul.f32 %v508, 1.442695
    %v526 = vpow.pop %v525
    %v527 = vmul.f32 %v509, 1.442695
    %v528 = vpow.pop %v527
    %v529 = vmul.f32 %v510, 1.442695
    %v530 = vpow.pop %v529
    %v531 = vmul.f32 %v511, 1.442695
    %v532 = vpow.pop %v531
    %v533 = vmul.f32 %v512, 1.442695
    %v534 = vpow.pop %v533
    %v535 = vmul.f32 %v513, 1.442695
    %v536 = vpow.pop %v535
    %v537 = vmul.f32 %v514, 1.442695
    %v538 = vpow.pop %v537
    %v539 = vmul.f32 %v515, 1.442695
    %v540 = vpow.pop %v539
    %v541 = vmul.f32 %v516, 1.442695
    %v542 = vpow.pop %v541
    %v543 = vmul.f32 %v517, 1.442695
    %v544 = vpow.pop %v543
    %v545 = vmul.f32 %v518, 1.442695
    %v546 = vpow.pop %v545
    %v547 = vmul.f32 %v519, 1.442695
    %v548 = vpow.pop %v547
    %v549 = vmul.f32 %v520, 1.442695
    %v550 = vpow.pop %v549
    %v551 = vmul.f32 %v521, 1.442695
    %v552 = vpow.pop %v551
    %v553 = vmul.f32 %v522, 1.442695
    %v554 = vpow.pop %v553
    %v555 = vsel %vm438, %v524, 0.0
    %v556 = vsel %vm439, %v526, 0.0
    %v557 = vsel %vm438, %v528, 0.0
    %v558 = vsel %vm439, %v530, 0.0
    %v559 = vsel %vm438, %v532, 0.0
    %v560 = vsel %vm439, %v534, 0.0
    %v561 = vsel %vm438, %v536, 0.0
    %v562 = vsel %vm439, %v538, 0.0
    %v563 = vsel %vm440, %v540, 0.0
    %v564 = vsel %vm441, %v542, 0.0
    %v565 = vsel %vm440, %v544, 0.0
    %v566 = vsel %vm441, %v546, 0.0
    %v567 = vsel %vm440, %v548, 0.0
    %v568 = vsel %vm441, %v550, 0.0
    %v569 = vsel %vm440, %v552, 0.0
    %v570 = vsel %vm441, %v554, 0.0
    %v571 = vsel %vm458, %v555, 0.0
    %572 = vadd.xlane.f32.xlu0 %v571
    %v573 = vpop.xlane.xlu0 %572
    %v574 = vsel %vm458, %v556, 0.0
    %575 = vadd.xlane.f32.xlu0 %v574
    %v576 = vpop.xlane.xlu0 %575
    %v577 = vsel %vm458, %v557, 0.0
    %578 = vadd.xlane.f32.xlu0 %v577
    %v579 = vpop.xlane.xlu0 %578
    %v580 = vsel %vm458, %v558, 0.0
    %581 = vadd.xlane.f32.xlu0 %v580
    %v582 = vpop.xlane.xlu0 %581
    %v583 = vsel %vm458, %v559, 0.0
    %584 = vadd.xlane.f32.xlu0 %v583
    %v585 = vpop.xlane.xlu0 %584
    %v586 = vsel %vm458, %v560, 0.0
    %587 = vadd.xlane.f32.xlu0 %v586
    %v588 = vpop.xlane.xlu0 %587
    %v589 = vsel %vm458, %v561, 0.0
    %590 = vadd.xlane.f32.xlu0 %v589
    %v591 = vpop.xlane.xlu0 %590
    %v592 = vsel %vm458, %v562, 0.0
    %593 = vadd.xlane.f32.xlu0 %v592
    %v594 = vpop.xlane.xlu0 %593
    %v595 = vsel %vm458, %v563, 0.0
    %596 = vadd.xlane.f32.xlu0 %v595
    %v597 = vpop.xlane.xlu0 %596
    %v598 = vsel %vm458, %v564, 0.0
    %599 = vadd.xlane.f32.xlu0 %v598
    %v600 = vpop.xlane.xlu0 %599
    %v601 = vsel %vm458, %v565, 0.0
    %602 = vadd.xlane.f32.xlu0 %v601
    %v603 = vpop.xlane.xlu0 %602
    %v604 = vsel %vm458, %v566, 0.0
    %605 = vadd.xlane.f32.xlu0 %v604
    %v606 = vpop.xlane.xlu0 %605
    %v607 = vsel %vm458, %v567, 0.0
    %608 = vadd.xlane.f32.xlu0 %v607
    %v609 = vpop.xlane.xlu0 %608
    %v610 = vsel %vm458, %v568, 0.0
    %611 = vadd.xlane.f32.xlu0 %v610
    %v612 = vpop.xlane.xlu0 %611
    %v613 = vsel %vm458, %v569, 0.0
    %614 = vadd.xlane.f32.xlu0 %v613
    %v615 = vpop.xlane.xlu0 %614
    %v616 = vsel %vm458, %v570, 0.0
    %617 = vadd.xlane.f32.xlu0 %v616
    %v618 = vpop.xlane.xlu0 %617
    %v619 = vmax.f32 %v573, 1e-20
    %v620 = vmax.f32 %v576, 1e-20
    %v621 = vmax.f32 %v579, 1e-20
    %v622 = vmax.f32 %v582, 1e-20
    %v623 = vmax.f32 %v585, 1e-20
    %v624 = vmax.f32 %v588, 1e-20
    %v625 = vmax.f32 %v591, 1e-20
    %v626 = vmax.f32 %v594, 1e-20
    %v627 = vmax.f32 %v597, 1e-20
    %v628 = vmax.f32 %v600, 1e-20
    %v629 = vmax.f32 %v603, 1e-20
    %v630 = vmax.f32 %v606, 1e-20
    %v631 = vmax.f32 %v609, 1e-20
    %v632 = vmax.f32 %v612, 1e-20
    %v633 = vmax.f32 %v615, 1e-20
    %v634 = vmax.f32 %v618, 1e-20
    %v635 = vrcp.pop %v619
    %v636 = vrcp.pop %v620
    %v637 = vrcp.pop %v621
    %v638 = vrcp.pop %v622
    %v639 = vrcp.pop %v623
    %v640 = vrcp.pop %v624
    %v641 = vrcp.pop %v625
    %v642 = vrcp.pop %v626
    %v643 = vrcp.pop %v627
    %v644 = vrcp.pop %v628
    %v645 = vrcp.pop %v629
    %v646 = vrcp.pop %v630
    %v647 = vrcp.pop %v631
    %v648 = vrcp.pop %v632
    %v649 = vrcp.pop %v633
    %v650 = vrcp.pop %v634
    %v651 = vmul.f32 %v555, %v635
    %v652 = vmul.f32 %v556, %v636
    %v653 = vmul.f32 %v557, %v637
    %v654 = vmul.f32 %v558, %v638
    %v655 = vmul.f32 %v559, %v639
    %v656 = vmul.f32 %v560, %v640
    %v657 = vmul.f32 %v561, %v641
    %v658 = vmul.f32 %v562, %v642
    %v659 = vmul.f32 %v563, %v643
    %v660 = vmul.f32 %v564, %v644
    %v661 = vmul.f32 %v565, %v645
    %v662 = vmul.f32 %v566, %v646
    %v663 = vmul.f32 %v567, %v647
    %v664 = vmul.f32 %v568, %v648
    %v665 = vmul.f32 %v569, %v649
    %v666 = vmul.f32 %v570, %v650
    %v667 = vld [vmem:[%s2] sm:$0xff]
    %v668 = vld [vmem:[%s2 + $0x8] sm:$0xff]
    %669 = vmatprep.subr.mxu0 0.0
    %670 = vmatpush1.msra.mxu0 %v667
    %671 = vmatprep.subr.mxu0 0.0
    %672 = vmatpush1.msra.mxu0 0.0
    %673 = vmatprep.subr.mxu0 0.0
    %674 = vmatpush1.msra.mxu0 0.0
    %675 = vmatprep.subr.mxu0 0.0
    %676 = vmatpush1.msra.mxu0 0.0
    %677 = vmatprep.subr.mxu0 0.0
    %678 = vmatpush1.msra.mxu0 0.0
    %679 = vmatprep.subr.mxu0 0.0
    %680 = vmatpush1.msra.mxu0 0.0
    %681 = vmatprep.subr.mxu0 0.0
    %682 = vmatpush1.msra.mxu0 0.0
    %683 = vmatprep.subr.mxu0 0.0
    %684 = vmatpush1.msra.mxu0 0.0
    %685 = vmatprep.subr.mxu0 0.0
    %686 = vmatpush1.msra.mxu0 0.0
    %687 = vmatprep.subr.mxu0 0.0
    %688 = vmatpush1.msra.mxu0 0.0
    %689 = vmatprep.subr.mxu0 0.0
    %690 = vmatpush1.msra.mxu0 0.0
    %691 = vmatprep.subr.mxu0 0.0
    %692 = vmatpush1.msra.mxu0 0.0
    %693 = vmatprep.subr.mxu0 0.0
    %694 = vmatpush1.msra.mxu0 0.0
    %695 = vmatprep.subr.mxu0 0.0
    %696 = vmatpush1.msra.mxu0 0.0
    %697 = vmatprep.subr.mxu0 0.0
    %698 = vmatpush1.msra.mxu0 0.0
    %699 = vmatprep.subr.mxu0 0.0
    %700 = vmatpush1.msra.mxu0 0.0
    %701 = vmatprep.subr.mxu0 0.0
    %702 = vmatpush1.msra.mxu0 0.0
    %703 = vmatprep.subr.mxu0 0.0
    %704 = vmatpush1.msra.mxu0 0.0
    %705 = vmatprep.subr.mxu0 0.0
    %706 = vmatpush1.msra.mxu0 0.0
    %707 = vmatprep.subr.mxu0 0.0
    %708 = vmatpush1.msra.mxu0 0.0
    %709 = vmatprep.subr.mxu0 0.0
    %710 = vmatpush1.msra.mxu0 0.0
    %711 = vmatprep.subr.mxu0 0.0
    %712 = vmatpush1.msra.mxu0 0.0
    %713 = vmatprep.subr.mxu0 0.0
    %714 = vmatpush1.msra.mxu0 0.0
    %715 = vmatprep.subr.mxu0 0.0
    %716 = vmatpush1.msra.mxu0 0.0
    %717 = vmatprep.subr.mxu0 0.0
    %718 = vmatpush1.msra.mxu0 0.0
    %719 = vmatprep.subr.mxu0 0.0
    %720 = vmatpush1.msra.mxu0 0.0
    %721 = vmatprep.subr.mxu0 0.0
    %722 = vmatpush1.msra.mxu0 0.0
    %723 = vmatprep.subr.mxu0 0.0
    %724 = vmatpush1.msra.mxu0 0.0
    %725 = vmatprep.subr.mxu0 0.0
    %726 = vmatpush1.msra.mxu0 0.0
    %727 = vmatprep.subr.mxu0 0.0
    %728 = vmatpush1.msra.mxu0 0.0
    %729 = vmatprep.subr.mxu0 0.0
    %730 = vmatpush1.msra.mxu0 0.0
    %731 = vmatprep.subr.mxu0 0.0
    %732 = vmatpush1.msra.mxu0 0.0
    %733 = vmatprep.mubr.f32.mxu0 0.0
    %734 = vmatmul.mubr.f32.gmra.mrb[0].mxu0 %v54
    %v735 = vpop.f32.mrb[0].mxu0
    %v736 = vadd.f32 0.0, %v735
    %v737 = vpop.f32.mrb[0].mxu0
    %738 = vmatprep.mubr.f32.mxu0 0.0
    %739 = vmatmul.mubr.f32.gmra.mrb[0].mxu0 %v57
    %v740 = vpop.f32.mrb[0].mxu0
    %v741 = vadd.f32 0.0, %v740
    %v742 = vpop.f32.mrb[0].mxu0
    %743 = vdwg.mxu0
    %744 = vmatprep.subr.mxu0 0.0
    %745 = vmatpush1.msra.mxu0 %v668
    %746 = vmatprep.subr.mxu0 0.0
    %747 = vmatpush1.msra.mxu0 0.0
    %748 = vmatprep.subr.mxu0 0.0
    %749 = vmatpush1.msra.mxu0 0.0
    %750 = vmatprep.subr.mxu0 0.0
    %751 = vmatpush1.msra.mxu0 0.0
    %752 = vmatprep.subr.mxu0 0.0
    %753 = vmatpush1.msra.mxu0 0.0
    %754 = vmatprep.subr.mxu0 0.0
    %755 = vmatpush1.msra.mxu0 0.0
    %756 = vmatprep.subr.mxu0 0.0
    %757 = vmatpush1.msra.mxu0 0.0
    %758 = vmatprep.subr.mxu0 0.0
    %759 = vmatpush1.msra.mxu0 0.0
    %760 = vmatprep.subr.mxu0 0.0
    %761 = vmatpush1.msra.mxu0 0.0
    %762 = vmatprep.subr.mxu0 0.0
    %763 = vmatpush1.msra.mxu0 0.0
    %764 = vmatprep.subr.mxu0 0.0
    %765 = vmatpush1.msra.mxu0 0.0
    %766 = vmatprep.subr.mxu0 0.0
    %767 = vmatpush1.msra.mxu0 0.0
    %768 = vmatprep.subr.mxu0 0.0
    %769 = vmatpush1.msra.mxu0 0.0
    %770 = vmatprep.subr.mxu0 0.0
    %771 = vmatpush1.msra.mxu0 0.0
    %772 = vmatprep.subr.mxu0 0.0
    %773 = vmatpush1.msra.mxu0 0.0
    %774 = vmatprep.subr.mxu0 0.0
    %775 = vmatpush1.msra.mxu0 0.0
    %776 = vmatprep.subr.mxu0 0.0
    %777 = vmatpush1.msra.mxu0 0.0
    %778 = vmatprep.subr.mxu0 0.0
    %779 = vmatpush1.msra.mxu0 0.0
    %780 = vmatprep.subr.mxu0 0.0
    %781 = vmatpush1.msra.mxu0 0.0
    %782 = vmatprep.subr.mxu0 0.0
    %783 = vmatpush1.msra.mxu0 0.0
    %784 = vmatprep.subr.mxu0 0.0
    %785 = vmatpush1.msra.mxu0 0.0
    %786 = vmatprep.subr.mxu0 0.0
    %787 = vmatpush1.msra.mxu0 0.0
    %788 = vmatprep.subr.mxu0 0.0
    %789 = vmatpush1.msra.mxu0 0.0
    %790 = vmatprep.subr.mxu0 0.0
    %791 = vmatpush1.msra.mxu0 0.0
    %792 = vmatprep.subr.mxu0 0.0
    %793 = vmatpush1.msra.mxu0 0.0
    %794 = vmatprep.subr.mxu0 0.0
    %795 = vmatpush1.msra.mxu0 0.0
    %796 = vmatprep.subr.mxu0 0.0
    %797 = vmatpush1.msra.mxu0 0.0
    %798 = vmatprep.subr.mxu0 0.0
    %799 = vmatpush1.msra.mxu0 0.0
    %800 = vmatprep.subr.mxu0 0.0
    %801 = vmatpush1.msra.mxu0 0.0
    %802 = vmatprep.subr.mxu0 0.0
    %803 = vmatpush1.msra.mxu0 0.0
    %804 = vmatprep.subr.mxu0 0.0
    %805 = vmatpush1.msra.mxu0 0.0
    %806 = vmatprep.subr.mxu0 0.0
    %807 = vmatpush1.msra.mxu0 0.0
    %808 = vmatprep.mubr.f32.mxu0 0.0
    %809 = vmatmul.mubr.f32.gmra.mrb[0].mxu0 %v133
    %v810 = vpop.f32.mrb[0].mxu0
    %v811 = vadd.f32 0.0, %v810
    %v812 = vpop.f32.mrb[0].mxu0
    %813 = vmatprep.mubr.f32.mxu0 0.0
    %814 = vmatmul.mubr.f32.gmra.mrb[0].mxu0 %v136
    %v815 = vpop.f32.mrb[0].mxu0
    %v816 = vadd.f32 0.0, %v815
    %v817 = vpop.f32.mrb[0].mxu0
    %818 = vdwg.mxu0
    %v820 = vsel %vm458, %v651, 0
    %v823 = vsel %vm458, %v652, 0
    %825 = vmatprep.subr.mxu0 0.0
    %826 = vmatpush1.msra.mxu0 %v736
    %827 = vmatprep.subr.mxu0 0.0
    %828 = vmatpush1.msra.mxu0 %v741
    %829 = vmatprep.subr.mxu0 0.0
    %830 = vmatpush1.msra.mxu0 0.0
    %831 = vmatprep.subr.mxu0 0.0
    %832 = vmatpush1.msra.mxu0 0.0
    %833 = vmatprep.subr.mxu0 0.0
    %834 = vmatpush1.msra.mxu0 0.0
    %835 = vmatprep.subr.mxu0 0.0
    %836 = vmatpush1.msra.mxu0 0.0
    %837 = vmatprep.subr.mxu0 0.0
    %838 = vmatpush1.msra.mxu0 0.0
    %839 = vmatprep.subr.mxu0 0.0
    %840 = vmatpush1.msra.mxu0 0.0
    %841 = vmatprep.subr.mxu0 0.0
    %842 = vmatpush1.msra.mxu0 0.0
    %843 = vmatprep.subr.mxu0 0.0
    %844 = vmatpush1.msra.mxu0 0.0
    %845 = vmatprep.subr.mxu0 0.0
    %846 = vmatpush1.msra.mxu0 0.0
    %847 = vmatprep.subr.mxu0 0.0
    %848 = vmatpush1.msra.mxu0 0.0
    %849 = vmatprep.subr.mxu0 0.0
    %850 = vmatpush1.msra.mxu0 0.0
    %851 = vmatprep.subr.mxu0 0.0
    %852 = vmatpush1.msra.mxu0 0.0
    %853 = vmatprep.subr.mxu0 0.0
    %854 = vmatpush1.msra.mxu0 0.0
    %855 = vmatprep.subr.mxu0 0.0
    %856 = vmatpush1.msra.mxu0 0.0
    %857 = vmatprep.subr.mxu0 0.0
    %858 = vmatpush1.msra.mxu0 0.0
    %859 = vmatprep.subr.mxu0 0.0
    %860 = vmatpush1.msra.mxu0 0.0
    %861 = vmatprep.subr.mxu0 0.0
    %862 = vmatpush1.msra.mxu0 0.0
    %863 = vmatprep.subr.mxu0 0.0
    %864 = vmatpush1.msra.mxu0 0.0
    %865 = vmatprep.subr.mxu0 0.0
    %866 = vmatpush1.msra.mxu0 0.0
    %867 = vmatprep.subr.mxu0 0.0
    %868 = vmatpush1.msra.mxu0 0.0
    %869 = vmatprep.subr.mxu0 0.0
    %870 = vmatpush1.msra.mxu0 0.0
    %871 = vmatprep.subr.mxu0 0.0
    %872 = vmatpush1.msra.mxu0 0.0
    %873 = vmatprep.subr.mxu0 0.0
    %874 = vmatpush1.msra.mxu0 0.0
    %875 = vmatprep.subr.mxu0 0.0
    %876 = vmatpush1.msra.mxu0 0.0
    %877 = vmatprep.subr.mxu0 0.0
    %878 = vmatpush1.msra.mxu0 0.0
    %879 = vmatprep.subr.mxu0 0.0
    %880 = vmatpush1.msra.mxu0 0.0
    %881 = vmatprep.subr.mxu0 0.0
    %882 = vmatpush1.msra.mxu0 0.0
    %883 = vmatprep.subr.mxu0 0.0
    %884 = vmatpush1.msra.mxu0 0.0
    %885 = vmatprep.subr.mxu0 0.0
    %886 = vmatpush1.msra.mxu0 0.0
    %887 = vmatprep.subr.mxu0 0.0
    %888 = vmatpush1.msra.mxu0 0.0
    %889 = vmatprep.mubr.f32.mxu0 0.0
    %890 = vmatmul.mubr.f32.gmra.mrb[0].mxu0 %v820
    %v891 = vpop.f32.mrb[0].mxu0
    %v892 = vadd.f32 0.0, %v891
    %v893 = vpop.f32.mrb[0].mxu0
    %894 = vmatprep.mubr.f32.mxu0 0.0
    %895 = vmatmul.mubr.f32.gmra.mrb[0].mxu0 %v823
    %v896 = vpop.f32.mrb[0].mxu0
    %v897 = vadd.f32 0.0, %v896
    %v898 = vpop.f32.mrb[0].mxu0
    %899 = vdwg.mxu0
    %902 = vrot.lane.b32.xlu0 %v736, 120
    %v903 = vpop.permute.xlu0 %902
    %904 = vrot.lane.b32.xlu0 %v741, 120
    %v905 = vpop.permute.xlu0 %904
    %v909 = vsel %vm458, %v653, 0
    %v912 = vsel %vm458, %v654, 0
    %914 = vmatprep.subr.mxu0 0.0
    %915 = vmatpush1.msra.mxu0 %v903
    %916 = vmatprep.subr.mxu0 0.0
    %917 = vmatpush1.msra.mxu0 %v905
    %918 = vmatprep.subr.mxu0 0.0
    %919 = vmatpush1.msra.mxu0 0.0
    %920 = vmatprep.subr.mxu0 0.0
    %921 = vmatpush1.msra.mxu0 0.0
    %922 = vmatprep.subr.mxu0 0.0
    %923 = vmatpush1.msra.mxu0 0.0
    %924 = vmatprep.subr.mxu0 0.0
    %925 = vmatpush1.msra.mxu0 0.0
    %926 = vmatprep.subr.mxu0 0.0
    %927 = vmatpush1.msra.mxu0 0.0
    %928 = vmatprep.subr.mxu0 0.0
    %929 = vmatpush1.msra.mxu0 0.0
    %930 = vmatprep.subr.mxu0 0.0
    %931 = vmatpush1.msra.mxu0 0.0
    %932 = vmatprep.subr.mxu0 0.0
    %933 = vmatpush1.msra.mxu0 0.0
    %934 = vmatprep.subr.mxu0 0.0
    %935 = vmatpush1.msra.mxu0 0.0
    %936 = vmatprep.subr.mxu0 0.0
    %937 = vmatpush1.msra.mxu0 0.0
    %938 = vmatprep.subr.mxu0 0.0
    %939 = vmatpush1.msra.mxu0 0.0
    %940 = vmatprep.subr.mxu0 0.0
    %941 = vmatpush1.msra.mxu0 0.0
    %942 = vmatprep.subr.mxu0 0.0
    %943 = vmatpush1.msra.mxu0 0.0
    %944 = vmatprep.subr.mxu0 0.0
    %945 = vmatpush1.msra.mxu0 0.0
    %946 = vmatprep.subr.mxu0 0.0
    %947 = vmatpush1.msra.mxu0 0.0
    %948 = vmatprep.subr.mxu0 0.0
    %949 = vmatpush1.msra.mxu0 0.0
    %950 = vmatprep.subr.mxu0 0.0
    %951 = vmatpush1.msra.mxu0 0.0
    %952 = vmatprep.subr.mxu0 0.0
    %953 = vmatpush1.msra.mxu0 0.0
    %954 = vmatprep.subr.mxu0 0.0
    %955 = vmatpush1.msra.mxu0 0.0
    %956 = vmatprep.subr.mxu0 0.0
    %957 = vmatpush1.msra.mxu0 0.0
    %958 = vmatprep.subr.mxu0 0.0
    %959 = vmatpush1.msra.mxu0 0.0
    %960 = vmatprep.subr.mxu0 0.0
    %961 = vmatpush1.msra.mxu0 0.0
    %962 = vmatprep.subr.mxu0 0.0
    %963 = vmatpush1.msra.mxu0 0.0
    %964 = vmatprep.subr.mxu0 0.0
    %965 = vmatpush1.msra.mxu0 0.0
    %966 = vmatprep.subr.mxu0 0.0
    %967 = vmatpush1.msra.mxu0 0.0
    %968 = vmatprep.subr.mxu0 0.0
    %969 = vmatpush1.msra.mxu0 0.0
    %970 = vmatprep.subr.mxu0 0.0
    %971 = vmatpush1.msra.mxu0 0.0
    %972 = vmatprep.subr.mxu0 0.0
    %973 = vmatpush1.msra.mxu0 0.0
    %974 = vmatprep.subr.mxu0 0.0
    %975 = vmatpush1.msra.mxu0 0.0
    %976 = vmatprep.subr.mxu0 0.0
    %977 = vmatpush1.msra.mxu0 0.0
    %978 = vmatprep.mubr.f32.mxu0 0.0
    %979 = vmatmul.mubr.f32.gmra.mrb[0].mxu0 %v909
    %v980 = vpop.f32.mrb[0].mxu0
    %v981 = vadd.f32 0.0, %v980
    %v982 = vpop.f32.mrb[0].mxu0
    %983 = vmatprep.mubr.f32.mxu0 0.0
    %984 = vmatmul.mubr.f32.gmra.mrb[0].mxu0 %v912
    %v985 = vpop.f32.mrb[0].mxu0
    %v986 = vadd.f32 0.0, %v985
    %v987 = vpop.f32.mrb[0].mxu0
    %988 = vdwg.mxu0
    %989 = vrot.lane.b32.xlu0 %v736, 112
    %v990 = vpop.permute.xlu0 %989
    %991 = vrot.lane.b32.xlu0 %v741, 112
    %v992 = vpop.permute.xlu0 %991
    %v996 = vsel %vm458, %v655, 0
    %v999 = vsel %vm458, %v656, 0
    %1001 = vmatprep.subr.mxu0 0.0
    %1002 = vmatpush1.msra.mxu0 %v990
    %1003 = vmatprep.subr.mxu0 0.0
    %1004 = vmatpush1.msra.mxu0 %v992
    %1005 = vmatprep.subr.mxu0 0.0
    %1006 = vmatpush1.msra.mxu0 0.0
    %1007 = vmatprep.subr.mxu0 0.0
    %1008 = vmatpush1.msra.mxu0 0.0
    %1009 = vmatprep.subr.mxu0 0.0
    %1010 = vmatpush1.msra.mxu0 0.0
    %1011 = vmatprep.subr.mxu0 0.0
    %1012 = vmatpush1.msra.mxu0 0.0
    %1013 = vmatprep.subr.mxu0 0.0
    %1014 = vmatpush1.msra.mxu0 0.0
    %1015 = vmatprep.subr.mxu0 0.0
    %1016 = vmatpush1.msra.mxu0 0.0
    %1017 = vmatprep.subr.mxu0 0.0
    %1018 = vmatpush1.msra.mxu0 0.0
    %1019 = vmatprep.subr.mxu0 0.0
    %1020 = vmatpush1.msra.mxu0 0.0
    %1021 = vmatprep.subr.mxu0 0.0
    %1022 = vmatpush1.msra.mxu0 0.0
    %1023 = vmatprep.subr.mxu0 0.0
    %1024 = vmatpush1.msra.mxu0 0.0
    %1025 = vmatprep.subr.mxu0 0.0
    %1026 = vmatpush1.msra.mxu0 0.0
    %1027 = vmatprep.subr.mxu0 0.0
    %1028 = vmatpush1.msra.mxu0 0.0
    %1029 = vmatprep.subr.mxu0 0.0
    %1030 = vmatpush1.msra.mxu0 0.0
    %1031 = vmatprep.subr.mxu0 0.0
    %1032 = vmatpush1.msra.mxu0 0.0
    %1033 = vmatprep.subr.mxu0 0.0
    %1034 = vmatpush1.msra.mxu0 0.0
    %1035 = vmatprep.subr.mxu0 0.0
    %1036 = vmatpush1.msra.mxu0 0.0
    %1037 = vmatprep.subr.mxu0 0.0
    %1038 = vmatpush1.msra.mxu0 0.0
    %1039 = vmatprep.subr.mxu0 0.0
    %1040 = vmatpush1.msra.mxu0 0.0
    %1041 = vmatprep.subr.mxu0 0.0
    %1042 = vmatpush1.msra.mxu0 0.0
    %1043 = vmatprep.subr.mxu0 0.0
    %1044 = vmatpush1.msra.mxu0 0.0
    %1045 = vmatprep.subr.mxu0 0.0
    %1046 = vmatpush1.msra.mxu0 0.0
    %1047 = vmatprep.subr.mxu0 0.0
    %1048 = vmatpush1.msra.mxu0 0.0
    %1049 = vmatprep.subr.mxu0 0.0
    %1050 = vmatpush1.msra.mxu0 0.0
    %1051 = vmatprep.subr.mxu0 0.0
    %1052 = vmatpush1.msra.mxu0 0.0
    %1053 = vmatprep.subr.mxu0 0.0
    %1054 = vmatpush1.msra.mxu0 0.0
    %1055 = vmatprep.subr.mxu0 0.0
    %1056 = vmatpush1.msra.mxu0 0.0
    %1057 = vmatprep.subr.mxu0 0.0
    %1058 = vmatpush1.msra.mxu0 0.0
    %1059 = vmatprep.subr.mxu0 0.0
    %1060 = vmatpush1.msra.mxu0 0.0
    %1061 = vmatprep.subr.mxu0 0.0
    %1062 = vmatpush1.msra.mxu0 0.0
    %1063 = vmatprep.subr.mxu0 0.0
    %1064 = vmatpush1.msra.mxu0 0.0
    %1065 = vmatprep.mubr.f32.mxu0 0.0
    %1066 = vmatmul.mubr.f32.gmra.mrb[0].mxu0 %v996
    %v1067 = vpop.f32.mrb[0].mxu0
    %v1068 = vadd.f32 0.0, %v1067
    %v1069 = vpop.f32.mrb[0].mxu0
    %1070 = vmatprep.mubr.f32.mxu0 0.0
    %1071 = vmatmul.mubr.f32.gmra.mrb[0].mxu0 %v999
    %v1072 = vpop.f32.mrb[0].mxu0
    %v1073 = vadd.f32 0.0, %v1072
    %v1074 = vpop.f32.mrb[0].mxu0
    %1075 = vdwg.mxu0
    %1076 = vrot.lane.b32.xlu0 %v736, 104
    %v1077 = vpop.permute.xlu0 %1076
    %1078 = vrot.lane.b32.xlu0 %v741, 104
    %v1079 = vpop.permute.xlu0 %1078
    %v1083 = vsel %vm458, %v657, 0
    %v1086 = vsel %vm458, %v658, 0
    %1088 = vmatprep.subr.mxu0 0.0
    %1089 = vmatpush1.msra.mxu0 %v1077
    %1090 = vmatprep.subr.mxu0 0.0
    %1091 = vmatpush1.msra.mxu0 %v1079
    %1092 = vmatprep.subr.mxu0 0.0
    %1093 = vmatpush1.msra.mxu0 0.0
    %1094 = vmatprep.subr.mxu0 0.0
    %1095 = vmatpush1.msra.mxu0 0.0
    %1096 = vmatprep.subr.mxu0 0.0
    %1097 = vmatpush1.msra.mxu0 0.0
    %1098 = vmatprep.subr.mxu0 0.0
    %1099 = vmatpush1.msra.mxu0 0.0
    %1100 = vmatprep.subr.mxu0 0.0
    %1101 = vmatpush1.msra.mxu0 0.0
    %1102 = vmatprep.subr.mxu0 0.0
    %1103 = vmatpush1.msra.mxu0 0.0
    %1104 = vmatprep.subr.mxu0 0.0
    %1105 = vmatpush1.msra.mxu0 0.0
    %1106 = vmatprep.subr.mxu0 0.0
    %1107 = vmatpush1.msra.mxu0 0.0
    %1108 = vmatprep.subr.mxu0 0.0
    %1109 = vmatpush1.msra.mxu0 0.0
    %1110 = vmatprep.subr.mxu0 0.0
    %1111 = vmatpush1.msra.mxu0 0.0
    %1112 = vmatprep.subr.mxu0 0.0
    %1113 = vmatpush1.msra.mxu0 0.0
    %1114 = vmatprep.subr.mxu0 0.0
    %1115 = vmatpush1.msra.mxu0 0.0
    %1116 = vmatprep.subr.mxu0 0.0
    %1117 = vmatpush1.msra.mxu0 0.0
    %1118 = vmatprep.subr.mxu0 0.0
    %1119 = vmatpush1.msra.mxu0 0.0
    %1120 = vmatprep.subr.mxu0 0.0
    %1121 = vmatpush1.msra.mxu0 0.0
    %1122 = vmatprep.subr.mxu0 0.0
    %1123 = vmatpush1.msra.mxu0 0.0
    %1124 = vmatprep.subr.mxu0 0.0
    %1125 = vmatpush1.msra.mxu0 0.0
    %1126 = vmatprep.subr.mxu0 0.0
    %1127 = vmatpush1.msra.mxu0 0.0
    %1128 = vmatprep.subr.mxu0 0.0
    %1129 = vmatpush1.msra.mxu0 0.0
    %1130 = vmatprep.subr.mxu0 0.0
    %1131 = vmatpush1.msra.mxu0 0.0
    %1132 = vmatprep.subr.mxu0 0.0
    %1133 = vmatpush1.msra.mxu0 0.0
    %1134 = vmatprep.subr.mxu0 0.0
    %1135 = vmatpush1.msra.mxu0 0.0
    %1136 = vmatprep.subr.mxu0 0.0
    %1137 = vmatpush1.msra.mxu0 0.0
    %1138 = vmatprep.subr.mxu0 0.0
    %1139 = vmatpush1.msra.mxu0 0.0
    %1140 = vmatprep.subr.mxu0 0.0
    %1141 = vmatpush1.msra.mxu0 0.0
    %1142 = vmatprep.subr.mxu0 0.0
    %1143 = vmatpush1.msra.mxu0 0.0
    %1144 = vmatprep.subr.mxu0 0.0
    %1145 = vmatpush1.msra.mxu0 0.0
    %1146 = vmatprep.subr.mxu0 0.0
    %1147 = vmatpush1.msra.mxu0 0.0
    %1148 = vmatprep.subr.mxu0 0.0
    %1149 = vmatpush1.msra.mxu0 0.0
    %1150 = vmatprep.subr.mxu0 0.0
    %1151 = vmatpush1.msra.mxu0 0.0
    %1152 = vmatprep.mubr.f32.mxu0 0.0
    %1153 = vmatmul.mubr.f32.gmra.mrb[0].mxu0 %v1083
    %v1154 = vpop.f32.mrb[0].mxu0
    %v1155 = vadd.f32 0.0, %v1154
    %v1156 = vpop.f32.mrb[0].mxu0
    %1157 = vmatprep.mubr.f32.mxu0 0.0
    %1158 = vmatmul.mubr.f32.gmra.mrb[0].mxu0 %v1086
    %v1159 = vpop.f32.mrb[0].mxu0
    %v1160 = vadd.f32 0.0, %v1159
    %v1161 = vpop.f32.mrb[0].mxu0
    %1162 = vdwg.mxu0
    %1165 = vrot.lane.b32.xlu0 %v981, 8
    %v1166 = vpop.permute.xlu0 %1165
    %1167 = vrot.lane.b32.xlu0 %v986, 8
    %v1168 = vpop.permute.xlu0 %1167
    %1173 = vrot.lane.b32.xlu0 %v1068, 16
    %v1174 = vpop.permute.xlu0 %1173
    %1175 = vrot.lane.b32.xlu0 %v1073, 16
    %v1176 = vpop.permute.xlu0 %1175
    %1181 = vrot.lane.b32.xlu0 %v1155, 24
    %v1182 = vpop.permute.xlu0 %1181
    %1183 = vrot.lane.b32.xlu0 %v1160, 24
    %v1184 = vpop.permute.xlu0 %1183
    %v1187 = vsel %vm49, %v892, %v1166
    %v1188 = vsel %vm49, %v897, %v1168
    %v1189 = vsel %vm458, %v1187, %v1174
    %v1190 = vsel %vm458, %v1188, %v1176
    %vm1191 = vcmask 195584
    %v1192 = vsel %vm1191, %v1189, %v1182
    %v1193 = vsel %vm1191, %v1190, %v1184
    %v1194 = vld [vmem:[%s4] sm:$0x1]
    %v1196 = vlaneseq
    %v1197 = vshrl.u32 %v1196, 7
    %v1198 = vsub.s32 0, %v1197
    %v1199 = vrot.slane %v1194, %v1198
    %v1201 = vadd.f32 %v1192, %v1199
    %v1202 = vadd.f32 %v1193, %v1199
    %vm1203 = vcmp.gt.f32.partialorder %v1201, 0.0
    %vm1204 = vcmp.gt.f32.partialorder %v1202, 0.0
    %v1205 = vmin.f32 %v1201, 0.0
    %v1206 = vmin.f32 %v1202, 0.0
    %v1207 = vmul.f32 %v1205, 1.442695
    %v1208 = vpow.pop %v1207
    %v1209 = vmul.f32 %v1206, 1.442695
    %v1210 = vpow.pop %v1209
    %v1211 = vsub.f32 %v1208, 1.0
    %v1212 = vsub.f32 %v1210, 1.0
    %v1213 = vsel %vm1203, %v1201, %v1211
    %v1214 = vsel %vm1204, %v1202, %v1212
    %vm1215 = vcmask 261120
    %1216 = vst.msk [vmem:[#allocation5] sm:$0xff] %vm1215, %v1213
    %1217 = vst.msk [vmem:[#allocation5 + $0x8] sm:$0xff] %vm1215, %v1214
    %v1219 = vsel %vm458, %v659, 0
    %v1222 = vsel %vm458, %v660, 0
    %1224 = vmatprep.subr.mxu0 0.0
    %1225 = vmatpush1.msra.mxu0 %v811
    %1226 = vmatprep.subr.mxu0 0.0
    %1227 = vmatpush1.msra.mxu0 %v816
    %1228 = vmatprep.subr.mxu0 0.0
    %1229 = vmatpush1.msra.mxu0 0.0
    %1230 = vmatprep.subr.mxu0 0.0
    %1231 = vmatpush1.msra.mxu0 0.0
    %1232 = vmatprep.subr.mxu0 0.0
    %1233 = vmatpush1.msra.mxu0 0.0
    %1234 = vmatprep.subr.mxu0 0.0
    %1235 = vmatpush1.msra.mxu0 0.0
    %1236 = vmatprep.subr.mxu0 0.0
    %1237 = vmatpush1.msra.mxu0 0.0
    %1238 = vmatprep.subr.mxu0 0.0
    %1239 = vmatpush1.msra.mxu0 0.0
    %1240 = vmatprep.subr.mxu0 0.0
    %1241 = vmatpush1.msra.mxu0 0.0
    %1242 = vmatprep.subr.mxu0 0.0
    %1243 = vmatpush1.msra.mxu0 0.0
    %1244 = vmatprep.subr.mxu0 0.0
    %1245 = vmatpush1.msra.mxu0 0.0
    %1246 = vmatprep.subr.mxu0 0.0
    %1247 = vmatpush1.msra.mxu0 0.0
    %1248 = vmatprep.subr.mxu0 0.0
    %1249 = vmatpush1.msra.mxu0 0.0
    %1250 = vmatprep.subr.mxu0 0.0
    %1251 = vmatpush1.msra.mxu0 0.0
    %1252 = vmatprep.subr.mxu0 0.0
    %1253 = vmatpush1.msra.mxu0 0.0
    %1254 = vmatprep.subr.mxu0 0.0
    %1255 = vmatpush1.msra.mxu0 0.0
    %1256 = vmatprep.subr.mxu0 0.0
    %1257 = vmatpush1.msra.mxu0 0.0
    %1258 = vmatprep.subr.mxu0 0.0
    %1259 = vmatpush1.msra.mxu0 0.0
    %1260 = vmatprep.subr.mxu0 0.0
    %1261 = vmatpush1.msra.mxu0 0.0
    %1262 = vmatprep.subr.mxu0 0.0
    %1263 = vmatpush1.msra.mxu0 0.0
    %1264 = vmatprep.subr.mxu0 0.0
    %1265 = vmatpush1.msra.mxu0 0.0
    %1266 = vmatprep.subr.mxu0 0.0
    %1267 = vmatpush1.msra.mxu0 0.0
    %1268 = vmatprep.subr.mxu0 0.0
    %1269 = vmatpush1.msra.mxu0 0.0
    %1270 = vmatprep.subr.mxu0 0.0
    %1271 = vmatpush1.msra.mxu0 0.0
    %1272 = vmatprep.subr.mxu0 0.0
    %1273 = vmatpush1.msra.mxu0 0.0
    %1274 = vmatprep.subr.mxu0 0.0
    %1275 = vmatpush1.msra.mxu0 0.0
    %1276 = vmatprep.subr.mxu0 0.0
    %1277 = vmatpush1.msra.mxu0 0.0
    %1278 = vmatprep.subr.mxu0 0.0
    %1279 = vmatpush1.msra.mxu0 0.0
    %1280 = vmatprep.subr.mxu0 0.0
    %1281 = vmatpush1.msra.mxu0 0.0
    %1282 = vmatprep.subr.mxu0 0.0
    %1283 = vmatpush1.msra.mxu0 0.0
    %1284 = vmatprep.subr.mxu0 0.0
    %1285 = vmatpush1.msra.mxu0 0.0
    %1286 = vmatprep.subr.mxu0 0.0
    %1287 = vmatpush1.msra.mxu0 0.0
    %1288 = vmatprep.mubr.f32.mxu0 0.0
    %1289 = vmatmul.mubr.f32.gmra.mrb[0].mxu0 %v1219
    %v1290 = vpop.f32.mrb[0].mxu0
    %v1291 = vadd.f32 0.0, %v1290
    %v1292 = vpop.f32.mrb[0].mxu0
    %1293 = vmatprep.mubr.f32.mxu0 0.0
    %1294 = vmatmul.mubr.f32.gmra.mrb[0].mxu0 %v1222
    %v1295 = vpop.f32.mrb[0].mxu0
    %v1296 = vadd.f32 0.0, %v1295
    %v1297 = vpop.f32.mrb[0].mxu0
    %1298 = vdwg.mxu0
    %1301 = vrot.lane.b32.xlu0 %v811, 120
    %v1302 = vpop.permute.xlu0 %1301
    %1303 = vrot.lane.b32.xlu0 %v816, 120
    %v1304 = vpop.permute.xlu0 %1303
    %v1308 = vsel %vm458, %v661, 0
    %v1311 = vsel %vm458, %v662, 0
    %1313 = vmatprep.subr.mxu0 0.0
    %1314 = vmatpush1.msra.mxu0 %v1302
    %1315 = vmatprep.subr.mxu0 0.0
    %1316 = vmatpush1.msra.mxu0 %v1304
    %1317 = vmatprep.subr.mxu0 0.0
    %1318 = vmatpush1.msra.mxu0 0.0
    %1319 = vmatprep.subr.mxu0 0.0
    %1320 = vmatpush1.msra.mxu0 0.0
    %1321 = vmatprep.subr.mxu0 0.0
    %1322 = vmatpush1.msra.mxu0 0.0
    %1323 = vmatprep.subr.mxu0 0.0
    %1324 = vmatpush1.msra.mxu0 0.0
    %1325 = vmatprep.subr.mxu0 0.0
    %1326 = vmatpush1.msra.mxu0 0.0
    %1327 = vmatprep.subr.mxu0 0.0
    %1328 = vmatpush1.msra.mxu0 0.0
    %1329 = vmatprep.subr.mxu0 0.0
    %1330 = vmatpush1.msra.mxu0 0.0
    %1331 = vmatprep.subr.mxu0 0.0
    %1332 = vmatpush1.msra.mxu0 0.0
    %1333 = vmatprep.subr.mxu0 0.0
    %1334 = vmatpush1.msra.mxu0 0.0
    %1335 = vmatprep.subr.mxu0 0.0
    %1336 = vmatpush1.msra.mxu0 0.0
    %1337 = vmatprep.subr.mxu0 0.0
    %1338 = vmatpush1.msra.mxu0 0.0
    %1339 = vmatprep.subr.mxu0 0.0
    %1340 = vmatpush1.msra.mxu0 0.0
    %1341 = vmatprep.subr.mxu0 0.0
    %1342 = vmatpush1.msra.mxu0 0.0
    %1343 = vmatprep.subr.mxu0 0.0
    %1344 = vmatpush1.msra.mxu0 0.0
    %1345 = vmatprep.subr.mxu0 0.0
    %1346 = vmatpush1.msra.mxu0 0.0
    %1347 = vmatprep.subr.mxu0 0.0
    %1348 = vmatpush1.msra.mxu0 0.0
    %1349 = vmatprep.subr.mxu0 0.0
    %1350 = vmatpush1.msra.mxu0 0.0
    %1351 = vmatprep.subr.mxu0 0.0
    %1352 = vmatpush1.msra.mxu0 0.0
    %1353 = vmatprep.subr.mxu0 0.0
    %1354 = vmatpush1.msra.mxu0 0.0
    %1355 = vmatprep.subr.mxu0 0.0
    %1356 = vmatpush1.msra.mxu0 0.0
    %1357 = vmatprep.subr.mxu0 0.0
    %1358 = vmatpush1.msra.mxu0 0.0
    %1359 = vmatprep.subr.mxu0 0.0
    %1360 = vmatpush1.msra.mxu0 0.0
    %1361 = vmatprep.subr.mxu0 0.0
    %1362 = vmatpush1.msra.mxu0 0.0
    %1363 = vmatprep.subr.mxu0 0.0
    %1364 = vmatpush1.msra.mxu0 0.0
    %1365 = vmatprep.subr.mxu0 0.0
    %1366 = vmatpush1.msra.mxu0 0.0
    %1367 = vmatprep.subr.mxu0 0.0
    %1368 = vmatpush1.msra.mxu0 0.0
    %1369 = vmatprep.subr.mxu0 0.0
    %1370 = vmatpush1.msra.mxu0 0.0
    %1371 = vmatprep.subr.mxu0 0.0
    %1372 = vmatpush1.msra.mxu0 0.0
    %1373 = vmatprep.subr.mxu0 0.0
    %1374 = vmatpush1.msra.mxu0 0.0
    %1375 = vmatprep.subr.mxu0 0.0
    %1376 = vmatpush1.msra.mxu0 0.0
    %1377 = vmatprep.mubr.f32.mxu0 0.0
    %1378 = vmatmul.mubr.f32.gmra.mrb[0].mxu0 %v1308
    %v1379 = vpop.f32.mrb[0].mxu0
    %v1380 = vadd.f32 0.0, %v1379
    %v1381 = vpop.f32.mrb[0].mxu0
    %1382 = vmatprep.mubr.f32.mxu0 0.0
    %1383 = vmatmul.mubr.f32.gmra.mrb[0].mxu0 %v1311
    %v1384 = vpop.f32.mrb[0].mxu0
    %v1385 = vadd.f32 0.0, %v1384
    %v1386 = vpop.f32.mrb[0].mxu0
    %1387 = vdwg.mxu0
    %1388 = vrot.lane.b32.xlu0 %v811, 112
    %v1389 = vpop.permute.xlu0 %1388
    %1390 = vrot.lane.b32.xlu0 %v816, 112
    %v1391 = vpop.permute.xlu0 %1390
    %v1395 = vsel %vm458, %v663, 0
    %v1398 = vsel %vm458, %v664, 0
    %1400 = vmatprep.subr.mxu0 0.0
    %1401 = vmatpush1.msra.mxu0 %v1389
    %1402 = vmatprep.subr.mxu0 0.0
    %1403 = vmatpush1.msra.mxu0 %v1391
    %1404 = vmatprep.subr.mxu0 0.0
    %1405 = vmatpush1.msra.mxu0 0.0
    %1406 = vmatprep.subr.mxu0 0.0
    %1407 = vmatpush1.msra.mxu0 0.0
    %1408 = vmatprep.subr.mxu0 0.0
    %1409 = vmatpush1.msra.mxu0 0.0
    %1410 = vmatprep.subr.mxu0 0.0
    %1411 = vmatpush1.msra.mxu0 0.0
    %1412 = vmatprep.subr.mxu0 0.0
    %1413 = vmatpush1.msra.mxu0 0.0
    %1414 = vmatprep.subr.mxu0 0.0
    %1415 = vmatpush1.msra.mxu0 0.0
    %1416 = vmatprep.subr.mxu0 0.0
    %1417 = vmatpush1.msra.mxu0 0.0
    %1418 = vmatprep.subr.mxu0 0.0
    %1419 = vmatpush1.msra.mxu0 0.0
    %1420 = vmatprep.subr.mxu0 0.0
    %1421 = vmatpush1.msra.mxu0 0.0
    %1422 = vmatprep.subr.mxu0 0.0
    %1423 = vmatpush1.msra.mxu0 0.0
    %1424 = vmatprep.subr.mxu0 0.0
    %1425 = vmatpush1.msra.mxu0 0.0
    %1426 = vmatprep.subr.mxu0 0.0
    %1427 = vmatpush1.msra.mxu0 0.0
    %1428 = vmatprep.subr.mxu0 0.0
    %1429 = vmatpush1.msra.mxu0 0.0
    %1430 = vmatprep.subr.mxu0 0.0
    %1431 = vmatpush1.msra.mxu0 0.0
    %1432 = vmatprep.subr.mxu0 0.0
    %1433 = vmatpush1.msra.mxu0 0.0
    %1434 = vmatprep.subr.mxu0 0.0
    %1435 = vmatpush1.msra.mxu0 0.0
    %1436 = vmatprep.subr.mxu0 0.0
    %1437 = vmatpush1.msra.mxu0 0.0
    %1438 = vmatprep.subr.mxu0 0.0
    %1439 = vmatpush1.msra.mxu0 0.0
    %1440 = vmatprep.subr.mxu0 0.0
    %1441 = vmatpush1.msra.mxu0 0.0
    %1442 = vmatprep.subr.mxu0 0.0
    %1443 = vmatpush1.msra.mxu0 0.0
    %1444 = vmatprep.subr.mxu0 0.0
    %1445 = vmatpush1.msra.mxu0 0.0
    %1446 = vmatprep.subr.mxu0 0.0
    %1447 = vmatpush1.msra.mxu0 0.0
    %1448 = vmatprep.subr.mxu0 0.0
    %1449 = vmatpush1.msra.mxu0 0.0
    %1450 = vmatprep.subr.mxu0 0.0
    %1451 = vmatpush1.msra.mxu0 0.0
    %1452 = vmatprep.subr.mxu0 0.0
    %1453 = vmatpush1.msra.mxu0 0.0
    %1454 = vmatprep.subr.mxu0 0.0
    %1455 = vmatpush1.msra.mxu0 0.0
    %1456 = vmatprep.subr.mxu0 0.0
    %1457 = vmatpush1.msra.mxu0 0.0
    %1458 = vmatprep.subr.mxu0 0.0
    %1459 = vmatpush1.msra.mxu0 0.0
    %1460 = vmatprep.subr.mxu0 0.0
    %1461 = vmatpush1.msra.mxu0 0.0
    %1462 = vmatprep.subr.mxu0 0.0
    %1463 = vmatpush1.msra.mxu0 0.0
    %1464 = vmatprep.mubr.f32.mxu0 0.0
    %1465 = vmatmul.mubr.f32.gmra.mrb[0].mxu0 %v1395
    %v1466 = vpop.f32.mrb[0].mxu0
    %v1467 = vadd.f32 0.0, %v1466
    %v1468 = vpop.f32.mrb[0].mxu0
    %1469 = vmatprep.mubr.f32.mxu0 0.0
    %1470 = vmatmul.mubr.f32.gmra.mrb[0].mxu0 %v1398
    %v1471 = vpop.f32.mrb[0].mxu0
    %v1472 = vadd.f32 0.0, %v1471
    %v1473 = vpop.f32.mrb[0].mxu0
    %1474 = vdwg.mxu0
    %1475 = vrot.lane.b32.xlu0 %v811, 104
    %v1476 = vpop.permute.xlu0 %1475
    %1477 = vrot.lane.b32.xlu0 %v816, 104
    %v1478 = vpop.permute.xlu0 %1477
    %v1482 = vsel %vm458, %v665, 0
    %v1485 = vsel %vm458, %v666, 0
    %1487 = vmatprep.subr.mxu0 0.0
    %1488 = vmatpush1.msra.mxu0 %v1476
    %1489 = vmatprep.subr.mxu0 0.0
    %1490 = vmatpush1.msra.mxu0 %v1478
    %1491 = vmatprep.subr.mxu0 0.0
    %1492 = vmatpush1.msra.mxu0 0.0
    %1493 = vmatprep.subr.mxu0 0.0
    %1494 = vmatpush1.msra.mxu0 0.0
    %1495 = vmatprep.subr.mxu0 0.0
    %1496 = vmatpush1.msra.mxu0 0.0
    %1497 = vmatprep.subr.mxu0 0.0
    %1498 = vmatpush1.msra.mxu0 0.0
    %1499 = vmatprep.subr.mxu0 0.0
    %1500 = vmatpush1.msra.mxu0 0.0
    %1501 = vmatprep.subr.mxu0 0.0
    %1502 = vmatpush1.msra.mxu0 0.0
    %1503 = vmatprep.subr.mxu0 0.0
    %1504 = vmatpush1.msra.mxu0 0.0
    %1505 = vmatprep.subr.mxu0 0.0
    %1506 = vmatpush1.msra.mxu0 0.0
    %1507 = vmatprep.subr.mxu0 0.0
    %1508 = vmatpush1.msra.mxu0 0.0
    %1509 = vmatprep.subr.mxu0 0.0
    %1510 = vmatpush1.msra.mxu0 0.0
    %1511 = vmatprep.subr.mxu0 0.0
    %1512 = vmatpush1.msra.mxu0 0.0
    %1513 = vmatprep.subr.mxu0 0.0
    %1514 = vmatpush1.msra.mxu0 0.0
    %1515 = vmatprep.subr.mxu0 0.0
    %1516 = vmatpush1.msra.mxu0 0.0
    %1517 = vmatprep.subr.mxu0 0.0
    %1518 = vmatpush1.msra.mxu0 0.0
    %1519 = vmatprep.subr.mxu0 0.0
    %1520 = vmatpush1.msra.mxu0 0.0
    %1521 = vmatprep.subr.mxu0 0.0
    %1522 = vmatpush1.msra.mxu0 0.0
    %1523 = vmatprep.subr.mxu0 0.0
    %1524 = vmatpush1.msra.mxu0 0.0
    %1525 = vmatprep.subr.mxu0 0.0
    %1526 = vmatpush1.msra.mxu0 0.0
    %1527 = vmatprep.subr.mxu0 0.0
    %1528 = vmatpush1.msra.mxu0 0.0
    %1529 = vmatprep.subr.mxu0 0.0
    %1530 = vmatpush1.msra.mxu0 0.0
    %1531 = vmatprep.subr.mxu0 0.0
    %1532 = vmatpush1.msra.mxu0 0.0
    %1533 = vmatprep.subr.mxu0 0.0
    %1534 = vmatpush1.msra.mxu0 0.0
    %1535 = vmatprep.subr.mxu0 0.0
    %1536 = vmatpush1.msra.mxu0 0.0
    %1537 = vmatprep.subr.mxu0 0.0
    %1538 = vmatpush1.msra.mxu0 0.0
    %1539 = vmatprep.subr.mxu0 0.0
    %1540 = vmatpush1.msra.mxu0 0.0
    %1541 = vmatprep.subr.mxu0 0.0
    %1542 = vmatpush1.msra.mxu0 0.0
    %1543 = vmatprep.subr.mxu0 0.0
    %1544 = vmatpush1.msra.mxu0 0.0
    %1545 = vmatprep.subr.mxu0 0.0
    %1546 = vmatpush1.msra.mxu0 0.0
    %1547 = vmatprep.subr.mxu0 0.0
    %1548 = vmatpush1.msra.mxu0 0.0
    %1549 = vmatprep.subr.mxu0 0.0
    %1550 = vmatpush1.msra.mxu0 0.0
    %1551 = vmatprep.mubr.f32.mxu0 0.0
    %1552 = vmatmul.mubr.f32.gmra.mrb[0].mxu0 %v1482
    %v1553 = vpop.f32.mrb[0].mxu0
    %v1554 = vadd.f32 0.0, %v1553
    %v1555 = vpop.f32.mrb[0].mxu0
    %1556 = vmatprep.mubr.f32.mxu0 0.0
    %1557 = vmatmul.mubr.f32.gmra.mrb[0].mxu0 %v1485
    %v1558 = vpop.f32.mrb[0].mxu0
    %v1559 = vadd.f32 0.0, %v1558
    %v1560 = vpop.f32.mrb[0].mxu0
    %1561 = vdwg.mxu0
    %1564 = vrot.lane.b32.xlu0 %v1380, 8
    %v1565 = vpop.permute.xlu0 %1564
    %1566 = vrot.lane.b32.xlu0 %v1385, 8
    %v1567 = vpop.permute.xlu0 %1566
    %1572 = vrot.lane.b32.xlu0 %v1467, 16
    %v1573 = vpop.permute.xlu0 %1572
    %1574 = vrot.lane.b32.xlu0 %v1472, 16
    %v1575 = vpop.permute.xlu0 %1574
    %1580 = vrot.lane.b32.xlu0 %v1554, 24
    %v1581 = vpop.permute.xlu0 %1580
    %1582 = vrot.lane.b32.xlu0 %v1559, 24
    %v1583 = vpop.permute.xlu0 %1582
    %v1586 = vsel %vm49, %v1291, %v1565
    %v1587 = vsel %vm49, %v1296, %v1567
    %v1588 = vsel %vm458, %v1586, %v1573
    %v1589 = vsel %vm458, %v1587, %v1575
    %v1590 = vsel %vm1191, %v1588, %v1581
    %v1591 = vsel %vm1191, %v1589, %v1583
    %s1592 = scalar_lea.vmem %s4, 1
    %v1593 = vld [vmem:[%s1592] sm:$0x1]
    %v1595 = vlaneseq
    %v1596 = vshrl.u32 %v1595, 7
    %v1597 = vsub.s32 0, %v1596
    %v1598 = vrot.slane %v1593, %v1597
    %v1600 = vadd.f32 %v1590, %v1598
    %v1601 = vadd.f32 %v1591, %v1598
    %vm1602 = vcmp.gt.f32.partialorder %v1600, 0.0
    %vm1603 = vcmp.gt.f32.partialorder %v1601, 0.0
    %v1604 = vmin.f32 %v1600, 0.0
    %v1605 = vmin.f32 %v1601, 0.0
    %v1606 = vmul.f32 %v1604, 1.442695
    %v1607 = vpow.pop %v1606
    %v1608 = vmul.f32 %v1605, 1.442695
    %v1609 = vpow.pop %v1608
    %v1610 = vsub.f32 %v1607, 1.0
    %v1611 = vsub.f32 %v1609, 1.0
    %v1612 = vsel %vm1602, %v1600, %v1610
    %v1613 = vsel %vm1603, %v1601, %v1611
    %s1614 = scalar_lea.vmem [#allocation5], 16
    %1615 = vst.msk [vmem:[%s1614] sm:$0xff] %vm1215, %v1612
    %1616 = vst.msk [vmem:[%s1614 + $0x8] sm:$0xff] %vm1215, %v1613
    // Predicated region
    $region26: #{tpu_custom_call.1} parent=1 // pred_check
      _
    $region27: #{tpu_custom_call.1} parent=1 // pred_check_branch
      %1618 = sbr.rel (0) target = $region29
    $region28: #{tpu_custom_call.1} parent=1 // pred_region
      %s1620 = ssub.s32 512, 512
      %1621 = vsyncadd [#allocation4], %s1620
      %s1622 = sshll.u32 [#allocation5], 4
      %s1623 = int_to_ptr.vmem [resolvable:$true] %s1622
      %1628 = dma.vmem_to_hbm [thread:$0]  %s1623, 512, %s5, [#allocation4], 128, 128, 8
    $region29: #{tpu_custom_call.1} parent=1 // pred_fallthru
      _
    // Predicated region
    $region30: #{tpu_custom_call.1} parent=1 // pred_check
      _
    $region31: #{tpu_custom_call.1} parent=1 // pred_check_branch
      %1630 = sbr.rel (0) target = $region33
    $region32: #{tpu_custom_call.1} parent=1 // pred_region
      %1631 = dma.done [#allocation4], 512
    $region33: #{tpu_custom_call.1} parent=1 // pred_fallthru
      _
    %1632 = vsyncpa [#allocation3], 1
    %1633 = vsyncpa [#allocation4], 1

</llo_original>
